<compile_context>
chip_gen: v6e
topology: v6e:2x2x1
jax: 0.10.0
libtpu: 0.0.40
codegen_flags: <defaults>
</compile_context>

<pallas_src>
import functools

import jax
import jax.numpy as jnp
from jax import lax
from jax.experimental import pallas as pl
from jax.experimental.pallas import tpu as pltpu


def _flash3_kernel(q_ref, k_ref, v_ref, o_ref, m_sc, l_sc, acc_sc):
    """One (batch*head, q-block, kv-block) grid step.

    q_ref : (1, bq,  Dh)  bf16 VMEM tile
    k_ref : (1, bkv, Dh)  bf16 VMEM tile
    v_ref : (1, bkv, Dh)  bf16 VMEM tile
    o_ref : (1, bq,  Dh)  bf16 VMEM tile (written on last kv step)
    m_sc  : (1, bq, 1)  f32 running row-max
    l_sc  : (1, bq, 1)  f32 running denominator
    acc_sc: (1, bq, Dh) f32 running (un-rescaled) numerator
    """
    kj = pl.program_id(2)

    @pl.when(kj == 0)
    def _init():
        m_sc[...] = jnp.full_like(m_sc, -jnp.inf)
        l_sc[...] = jnp.zeros_like(l_sc)
        acc_sc[...] = jnp.zeros_like(acc_sc)

    q = q_ref[0]                      # (bq, Dh)  bf16
    k = k_ref[0]                      # (bkv, Dh) bf16
    v = v_ref[0]                      # (bkv, Dh) bf16

    # S = Q @ K^T  (no 1/sqrt(d) scaling in the reference module).
    # Contract last dims directly -> no explicit transpose of K.
    s = lax.dot_general(q, k, (((1,), (1,)), ((), ())),
                        preferred_element_type=jnp.float32)        # (bq, bkv) f32

    m_old = m_sc[0]                                                # (bq, 1)
    m_new = jnp.maximum(m_old, s.max(axis=-1, keepdims=True))      # (bq, 1)
    p = jnp.exp(s - m_new)                                         # (bq, bkv) f32

    l_sc[0] = jnp.exp(m_old - m_new) * l_sc[0] + p.sum(axis=-1, keepdims=True)
    # Reference semantics: accumulator is NOT rescaled by exp(m_old - m_new).
    acc_sc[0] = acc_sc[0] + jnp.dot(p.astype(v.dtype), v,
                                    preferred_element_type=jnp.float32)
    m_sc[0] = m_new

    @pl.when(kj == pl.num_programs(2) - 1)
    def _finalize():
        inv_l = pl.reciprocal(l_sc[0], approx=True)                # EUP slot
        o_ref[0] = (acc_sc[0] * inv_l).astype(o_ref.dtype)         # bf16 out


def flash_attention3_core(q, k, v, *, block_size_q, block_size_kv):
    """q, k, v: (BH, T, Dh) bf16 -> (BH, T, Dh) bf16."""
    BH, T, Dh = q.shape
    assert T % block_size_q == 0 and T % block_size_kv == 0
    n_q = T // block_size_q
    n_kv = T // block_size_kv

    grid_spec = pltpu.PrefetchScalarGridSpec(
        num_scalar_prefetch=0,
        grid=(BH, n_q, n_kv),
        in_specs=[
            pl.BlockSpec((1, block_size_q, Dh), lambda bh, qi, kj: (bh, qi, 0)),
            pl.BlockSpec((1, block_size_kv, Dh), lambda bh, qi, kj: (bh, kj, 0)),
            pl.BlockSpec((1, block_size_kv, Dh), lambda bh, qi, kj: (bh, kj, 0)),
        ],
        # Output block index ignores kj -> VMEM-resident across the kv sweep.
        out_specs=pl.BlockSpec((1, block_size_q, Dh),
                               lambda bh, qi, kj: (bh, qi, 0)),
        scratch_shapes=[
            pltpu.VMEM((1, block_size_q, 1), jnp.float32),   # m
            pltpu.VMEM((1, block_size_q, 1), jnp.float32),   # l
            pltpu.VMEM((1, block_size_q, Dh), jnp.float32),  # acc (f32; out is bf16)
        ],
    )

    return pl.pallas_call(
        _flash3_kernel,
        out_shape=jax.ShapeDtypeStruct((BH, T, Dh), jnp.bfloat16),
        grid_spec=grid_spec,
        compiler_params=pltpu.CompilerParams(
            dimension_semantics=("parallel", "parallel", "arbitrary"),
            # Working set at bq=bkv=256, Dh=128: double-buffered bf16 Q/K/V/O
            # (~0.5 MiB) + f32 acc (128 KiB) + f32 S/P intermediate (256 KiB)
            # ~= 1 MiB, so 32 MiB is ample even on v7x (64 MiB physical VMEM).
            vmem_limit_bytes=32 * 1024 * 1024),
    )(q, k, v)


def init_params(d_model, key):
    """Deterministic parameter init matching nn.Linear(d_model, d_model) x 4.

    Returned as a plain dict so it is a valid JAX pytree (jit-compatible).
    """
    ks = jax.random.split(key, 8)
    bound = 1.0 / (d_model ** 0.5)

    def lin(kw, kb):
        w = jax.random.uniform(kw, (d_model, d_model), jnp.float32, -bound, bound)
        b = jax.random.uniform(kb, (d_model,), jnp.float32, -bound, bound)
        return w, b

    q_w, q_b = lin(ks[0], ks[1])
    k_w, k_b = lin(ks[2], ks[3])
    v_w, v_b = lin(ks[4], ks[5])
    o_w, o_b = lin(ks[6], ks[7])
    return dict(q_w=q_w, q_b=q_b, k_w=k_w, k_b=k_b,
                v_w=v_w, v_b=v_b, o_w=o_w, o_b=o_b)


def flash_attention3_forward(params, x, *, n_heads, block_size_q, block_size_kv):
    """x: (B, T, C) float32 -> (B, T, C) float32 (matches PyTorch forward)."""
    B, T, C = x.shape
    assert C % n_heads == 0
    Dh = C // n_heads

    x_bf = x.astype(jnp.bfloat16)

    # Per-head projections with the head transpose folded into the matmul:
    # nn.Linear y = x @ W^T + b, W is (C_out, C_in); W.reshape(H, Dh, C) gives
    # the per-head slices directly, producing (B, H, T, Dh) without a
    # standalone HBM transpose of Q/K/V.  bf16 inputs -> bf16 MXU matmul with
    # f32 accumulation; bias added in f32, result cast to bf16 for the kernel.
    def proj_heads(w, b):
        w_h = w.reshape(n_heads, Dh, C).astype(jnp.bfloat16)
        b_h = b.reshape(n_heads, Dh)
        y = jnp.einsum('btc,hdc->bhtd', x_bf, w_h,
                       preferred_element_type=jnp.float32)
        y = y + b_h[None, :, None, :]
        return y.astype(jnp.bfloat16).reshape(B * n_heads, T, Dh)

    Q = proj_heads(params['q_w'], params['q_b'])
    K = proj_heads(params['k_w'], params['k_b'])
    V = proj_heads(params['v_w'], params['v_b'])

    O = flash_attention3_core(Q, K, V,
                              block_size_q=block_size_q,
                              block_size_kv=block_size_kv)       # (BH, T, Dh) bf16
    O = O.reshape(B, n_heads, T, Dh)

    # Output projection with the inverse head transpose folded in (bf16 MXU,
    # f32 accumulation, f32 result).
    o_w_h = params['o_w'].reshape(C, n_heads, Dh).astype(jnp.bfloat16)
    out = jnp.einsum('bhtd,ohd->bto', O, o_w_h,
                     preferred_element_type=jnp.float32)
    return out + params['o_b']


def _reference_forward(params, x, *, n_heads, block_size_q, block_size_kv):
    """Pure-JAX replica of the PyTorch block loop (incl. the un-rescaled O
    accumulator and no 1/sqrt(d) scaling), emulating the kernel's bf16 casts
    (projections, P before PV, attention output) so the check isolates the
    Pallas tiling/pipelining."""
    B, T, C = x.shape
    Dh = C // n_heads
    x_bf = x.astype(jnp.bfloat16)

    def proj(w, b):
        w_h = w.reshape(n_heads, Dh, C).astype(jnp.bfloat16)
        b_h = b.reshape(n_heads, Dh)
        y = jnp.einsum('btc,hdc->bhtd', x_bf, w_h,
                       preferred_element_type=jnp.float32)
        y = y + b_h[None, :, None, :]
        return y.astype(jnp.bfloat16).astype(jnp.float32)        # (B, H, T, Dh)

    Q = proj(params['q_w'], params['q_b'])
    K = proj(params['k_w'], params['k_b'])
    V = proj(params['v_w'], params['v_b'])

    O = jnp.zeros((B, n_heads, T, Dh), jnp.float32)
    for i in range(0, T, block_size_q):
        Qb = Q[:, :, i:i + block_size_q]
        Ob = jnp.zeros_like(Qb)
        Lb = jnp.zeros((B, n_heads, Qb.shape[2]), jnp.float32)
        Mb = jnp.full((B, n_heads, Qb.shape[2]), -jnp.inf, jnp.float32)
        for j in range(0, T, block_size_kv):
            Kb = K[:, :, j:j + block_size_kv]
            Vb = V[:, :, j:j + block_size_kv]
            S = Qb @ jnp.swapaxes(Kb, -2, -1)
            M_old = Mb
            Mb = jnp.maximum(Mb, S.max(axis=-1))
            P = jnp.exp(S - Mb[..., None])
            Lb = jnp.exp(M_old - Mb) * Lb + P.sum(axis=-1)
            Pb = P.astype(jnp.bfloat16).astype(jnp.float32)
            Ob = Ob + Pb @ Vb
        Ob = Ob / Lb[..., None]
        O = O.at[:, :, i:i + block_size_q].set(Ob)
    O = O.astype(jnp.bfloat16)                                   # kernel emits bf16
    o_w_h = params['o_w'].reshape(C, n_heads, Dh).astype(jnp.bfloat16)
    out = jnp.einsum('bhtd,ohd->bto', O, o_w_h,
                     preferred_element_type=jnp.float32)
    return out + params['o_b']


if __name__ == "__main__":
    # Small but MXU/lane-aligned shapes: head_dim = 128, 256x256 blocks
    # (fills the 256x256 MXU on v6e/v7x, amortizes per-step overhead).
    B, T = 2, 512
    d_model, n_heads = 256, 2           # Dh = 128
    block_size_q, block_size_kv = 256, 256
    num_blocks_kv = T // block_size_kv  # kept for API parity with the module
    # grid = (BH=4, n_q=2, n_kv=2); BH*n_q = 8 shards evenly over v7x's 2 TCs.

    key = jax.random.PRNGKey(0)
    k_param, k_x = jax.random.split(key)
    params = init_params(d_model, k_param)
    x = jax.random.normal(k_x, (B, T, d_model), jnp.float32)

    fwd = functools.partial(flash_attention3_forward,
                            n_heads=n_heads,
                            block_size_q=block_size_q,
                            block_size_kv=block_size_kv)
    out = jax.jit(fwd)(params, x)
    out = jax.block_until_ready(out)

    ref = _reference_forward(params, x,
                             n_heads=n_heads,
                             block_size_q=block_size_q,
                             block_size_kv=block_size_kv)
    assert out.shape == (B, T, d_model)
    max_diff = jnp.max(jnp.abs(out - ref))
    assert jnp.allclose(out, ref, rtol=1e-2, atol=1e-2), \
        f"max abs diff {max_diff}"

    print("KERNEL_OK")
</pallas_src>

<mosaic_0001>
module attributes {stable_mosaic.version = 11 : i64} {
  func.func @_flash3_kernel(%arg0: i32, %arg1: i32, %arg2: i32, %arg3: memref<1x256x128xbf16, #tpu.memory_space<vmem>>, %arg4: memref<1x256x128xbf16, #tpu.memory_space<vmem>>, %arg5: memref<1x256x128xbf16, #tpu.memory_space<vmem>>, %arg6: memref<1x256x128xbf16, #tpu.memory_space<vmem>>, %arg7: memref<1x256x1xf32, #tpu.memory_space<vmem>>, %arg8: memref<1x256x1xf32, #tpu.memory_space<vmem>>, %arg9: memref<1x256x128xf32, #tpu.memory_space<vmem>>) attributes {dimension_semantics = [#tpu.dimension_semantics<parallel>, #tpu.dimension_semantics<parallel>, #tpu.dimension_semantics<arbitrary>], iteration_bounds = array<i64: 4, 2, 2>, scalar_prefetch = 0 : i64, scratch_operands = 3 : i64, tpu.core_type = #tpu.core_type<tc>, window_params = [{transform_indices = @transform_0, window_bounds = array<i64: 1, 256, 128>}, {transform_indices = @transform_1, window_bounds = array<i64: 1, 256, 128>}, {transform_indices = @transform_2, window_bounds = array<i64: 1, 256, 128>}, {transform_indices = @transform_3, window_bounds = array<i64: 1, 256, 128>}]} {
    %c0_i32 = arith.constant 0 : i32
    %0 = arith.cmpi eq, %arg2, %c0_i32 : i32
    %1 = arith.extui %0 : i1 to i32
    %c0_i32_0 = arith.constant 0 : i32
    %2 = arith.cmpi ne, %1, %c0_i32_0 : i32
    scf.if %2 {
      %cst_31 = arith.constant 0xFF800000 : f32
      %43 = vector.broadcast %cst_31 : f32 to vector<1x256x1xf32>
      %c0_32 = arith.constant 0 : index
      %c0_33 = arith.constant 0 : index
      %c0_34 = arith.constant 0 : index
      %44 = vector.load %arg7[%c0_32, %c0_33, %c0_34] : memref<1x256x1xf32, #tpu.memory_space<vmem>>, vector<1x256x1xf32>
      tpu.vector_store %arg7[%c0_32, %c0_33, %c0_34], %43 {strides = array<i32>} : memref<1x256x1xf32, #tpu.memory_space<vmem>>, vector<1x256x1xf32>,
      %cst_35 = arith.constant 0.000000e+00 : f32
      %45 = vector.broadcast %cst_35 : f32 to vector<1x256x1xf32>
      %c0_36 = arith.constant 0 : index
      %c0_37 = arith.constant 0 : index
      %c0_38 = arith.constant 0 : index
      %46 = vector.load %arg8[%c0_36, %c0_37, %c0_38] : memref<1x256x1xf32, #tpu.memory_space<vmem>>, vector<1x256x1xf32>
      tpu.vector_store %arg8[%c0_36, %c0_37, %c0_38], %45 {strides = array<i32>} : memref<1x256x1xf32, #tpu.memory_space<vmem>>, vector<1x256x1xf32>,
      %cst_39 = arith.constant 0.000000e+00 : f32
      %47 = vector.broadcast %cst_39 : f32 to vector<1x256x128xf32>
      %c0_40 = arith.constant 0 : index
      %c0_41 = arith.constant 0 : index
      %c0_42 = arith.constant 0 : index
      %48 = vector.load %arg9[%c0_40, %c0_41, %c0_42] : memref<1x256x128xf32, #tpu.memory_space<vmem>>, vector<1x256x128xf32>
      tpu.vector_store %arg9[%c0_40, %c0_41, %c0_42], %47 {strides = array<i32>} : memref<1x256x128xf32, #tpu.memory_space<vmem>>, vector<1x256x128xf32>,
    } else {
    }
    %c0 = arith.constant 0 : index
    %c0_1 = arith.constant 0 : index
    %c0_2 = arith.constant 0 : index
    %3 = vector.load %arg3[%c0, %c0_1, %c0_2] : memref<1x256x128xbf16, #tpu.memory_space<vmem>>, vector<1x256x128xbf16>
    %4 = vector.shape_cast %3 : vector<1x256x128xbf16> to vector<256x128xbf16>
    %c0_3 = arith.constant 0 : index
    %c0_4 = arith.constant 0 : index
    %c0_5 = arith.constant 0 : index
    %5 = vector.load %arg4[%c0_3, %c0_4, %c0_5] : memref<1x256x128xbf16, #tpu.memory_space<vmem>>, vector<1x256x128xbf16>
    %6 = vector.shape_cast %5 : vector<1x256x128xbf16> to vector<256x128xbf16>
    %c0_6 = arith.constant 0 : index
    %c0_7 = arith.constant 0 : index
    %c0_8 = arith.constant 0 : index
    %7 = vector.load %arg5[%c0_6, %c0_7, %c0_8] : memref<1x256x128xbf16, #tpu.memory_space<vmem>>, vector<1x256x128xbf16>
    %8 = vector.shape_cast %7 : vector<1x256x128xbf16> to vector<256x128xbf16>
    %cst = arith.constant dense<0.000000e+00> : vector<256x256xf32>
    %9 = tpu.matmul %4, %6, %cst {dimension_numbers = #tpu.dot_dimension_numbers<[1], [1], [0], [0], [0, 0, 1, 0], [], []>} : vector<256x128xbf16>, vector<256x128xbf16>, vector<256x256xf32> -> vector<256x256xf32>
    %c0_9 = arith.constant 0 : index
    %c0_10 = arith.constant 0 : index
    %c0_11 = arith.constant 0 : index
    %10 = vector.load %arg7[%c0_9, %c0_10, %c0_11] : memref<1x256x1xf32, #tpu.memory_space<vmem>>, vector<1x256x1xf32>
    %11 = vector.shape_cast %10 : vector<1x256x1xf32> to vector<256x1xf32>
    %cst_12 = arith.constant dense<0xFF800000> : vector<256xf32>
    %12 = vector.multi_reduction <maximumf>, %9, %cst_12 [1] : vector<256x256xf32> to vector<256xf32>
    %13 = vector.shape_cast %12 : vector<256xf32> to vector<256x1xf32>
    %14 = arith.maximumf %11, %13 : vector<256x1xf32>
    %15 = vector.broadcast %14 : vector<256x1xf32> to vector<256x256xf32>
    %16 = arith.subf %9, %15 : vector<256x256xf32>
    %17 = math.exp %16 : vector<256x256xf32>
    %18 = arith.subf %11, %14 : vector<256x1xf32>
    %19 = math.exp %18 : vector<256x1xf32>
    %c0_13 = arith.constant 0 : index
    %c0_14 = arith.constant 0 : index
    %c0_15 = arith.constant 0 : index
    %20 = vector.load %arg8[%c0_13, %c0_14, %c0_15] : memref<1x256x1xf32, #tpu.memory_space<vmem>>, vector<1x256x1xf32>
    %21 = vector.shape_cast %20 : vector<1x256x1xf32> to vector<256x1xf32>
    %22 = arith.mulf %19, %21 : vector<256x1xf32>
    %cst_16 = arith.constant dense<0.000000e+00> : vector<256xf32>
    %23 = vector.multi_reduction <add>, %17, %cst_16 [1] : vector<256x256xf32> to vector<256xf32>
    %24 = vector.shape_cast %23 : vector<256xf32> to vector<256x1xf32>
    %25 = arith.addf %22, %24 : vector<256x1xf32>
    %c0_17 = arith.constant 0 : index
    %c0_18 = arith.constant 0 : index
    %c0_19 = arith.constant 0 : index
    %26 = vector.load %arg8[%c0_17, %c0_18, %c0_19] : memref<1x256x1xf32, #tpu.memory_space<vmem>>, vector<1x256x1xf32>
    %27 = vector.shape_cast %26 : vector<1x256x1xf32> to vector<256x1xf32>
    %28 = vector.shape_cast %25 : vector<256x1xf32> to vector<1x256x1xf32>
    tpu.vector_store %arg8[%c0_17, %c0_18, %c0_19], %28 {strides = array<i32>} : memref<1x256x1xf32, #tpu.memory_space<vmem>>, vector<1x256x1xf32>,
    %c0_20 = arith.constant 0 : index
    %c0_21 = arith.constant 0 : index
    %c0_22 = arith.constant 0 : index
    %29 = vector.load %arg9[%c0_20, %c0_21, %c0_22] : memref<1x256x128xf32, #tpu.memory_space<vmem>>, vector<1x256x128xf32>
    %30 = vector.shape_cast %29 : vector<1x256x128xf32> to vector<256x128xf32>
    %31 = arith.truncf %17 : vector<256x256xf32> to vector<256x256xbf16>
    %cst_23 = arith.constant dense<0.000000e+00> : vector<256x128xf32>
    %32 = tpu.matmul %31, %8, %cst_23 {dimension_numbers = #tpu.dot_dimension_numbers<[1], [0], [0], [1], [0, 0, 1, 1], [], []>} : vector<256x256xbf16>, vector<256x128xbf16>, vector<256x128xf32> -> vector<256x128xf32>
    %33 = arith.addf %30, %32 : vector<256x128xf32>
    %c0_24 = arith.constant 0 : index
    %c0_25 = arith.constant 0 : index
    %c0_26 = arith.constant 0 : index
    %34 = vector.load %arg9[%c0_24, %c0_25, %c0_26] : memref<1x256x128xf32, #tpu.memory_space<vmem>>, vector<1x256x128xf32>
    %35 = vector.shape_cast %34 : vector<1x256x128xf32> to vector<256x128xf32>
    %36 = vector.shape_cast %33 : vector<256x128xf32> to vector<1x256x128xf32>
    tpu.vector_store %arg9[%c0_24, %c0_25, %c0_26], %36 {strides = array<i32>} : memref<1x256x128xf32, #tpu.memory_space<vmem>>, vector<1x256x128xf32>,
    %c0_27 = arith.constant 0 : index
    %c0_28 = arith.constant 0 : index
    %c0_29 = arith.constant 0 : index
    %37 = vector.load %arg7[%c0_27, %c0_28, %c0_29] : memref<1x256x1xf32, #tpu.memory_space<vmem>>, vector<1x256x1xf32>
    %38 = vector.shape_cast %37 : vector<1x256x1xf32> to vector<256x1xf32>
    %39 = vector.shape_cast %14 : vector<256x1xf32> to vector<1x256x1xf32>
    tpu.vector_store %arg7[%c0_27, %c0_28, %c0_29], %39 {strides = array<i32>} : memref<1x256x1xf32, #tpu.memory_space<vmem>>, vector<1x256x1xf32>,
    %c1_i32 = arith.constant 1 : i32
    %40 = arith.cmpi eq, %arg2, %c1_i32 : i32
    %41 = arith.extui %40 : i1 to i32
    %c0_i32_30 = arith.constant 0 : i32
    %42 = arith.cmpi ne, %41, %c0_i32_30 : i32
    scf.if %42 {
      %c0_31 = arith.constant 0 : index
      %c0_32 = arith.constant 0 : index
      %c0_33 = arith.constant 0 : index
      %43 = vector.load %arg8[%c0_31, %c0_32, %c0_33] : memref<1x256x1xf32, #tpu.memory_space<vmem>>, vector<1x256x1xf32>
      %44 = vector.shape_cast %43 : vector<1x256x1xf32> to vector<256x1xf32>
      %45 = tpu.reciprocal %44 {approx = true} : vector<256x1xf32> -> vector<256x1xf32>
      %c0_34 = arith.constant 0 : index
      %c0_35 = arith.constant 0 : index
      %c0_36 = arith.constant 0 : index
      %46 = vector.load %arg9[%c0_34, %c0_35, %c0_36] : memref<1x256x128xf32, #tpu.memory_space<vmem>>, vector<1x256x128xf32>
      %47 = vector.shape_cast %46 : vector<1x256x128xf32> to vector<256x128xf32>
      %48 = vector.broadcast %45 : vector<256x1xf32> to vector<256x128xf32>
      %49 = arith.mulf %47, %48 : vector<256x128xf32>
      %50 = arith.truncf %49 : vector<256x128xf32> to vector<256x128xbf16>
      %c0_37 = arith.constant 0 : index
      %c0_38 = arith.constant 0 : index
      %c0_39 = arith.constant 0 : index
      %51 = vector.load %arg6[%c0_37, %c0_38, %c0_39] : memref<1x256x128xbf16, #tpu.memory_space<vmem>>, vector<1x256x128xbf16>
      %52 = vector.shape_cast %51 : vector<1x256x128xbf16> to vector<256x128xbf16>
      %53 = vector.shape_cast %50 : vector<256x128xbf16> to vector<1x256x128xbf16>
      tpu.vector_store %arg6[%c0_37, %c0_38, %c0_39], %53 {strides = array<i32>} : memref<1x256x128xbf16, #tpu.memory_space<vmem>>, vector<1x256x128xbf16>,
    } else {
    }
    return
  }
  func.func @transform_0(%arg0: i32, %arg1: i32, %arg2: i32) -> (i32, i32, i32) {
    %c0_i32 = arith.constant 0 : i32
    %c0_i32_0 = arith.constant 0 : i32
    return %arg0, %arg1, %c0_i32 : i32, i32, i32
  }
  func.func @transform_1(%arg0: i32, %arg1: i32, %arg2: i32) -> (i32, i32, i32) {
    %c0_i32 = arith.constant 0 : i32
    %c0_i32_0 = arith.constant 0 : i32
    return %arg0, %arg2, %c0_i32 : i32, i32, i32
  }
  func.func @transform_2(%arg0: i32, %arg1: i32, %arg2: i32) -> (i32, i32, i32) {
    %c0_i32 = arith.constant 0 : i32
    %c0_i32_0 = arith.constant 0 : i32
    return %arg0, %arg2, %c0_i32 : i32, i32, i32
  }
  func.func @transform_3(%arg0: i32, %arg1: i32, %arg2: i32) -> (i32, i32, i32) {
    %c0_i32 = arith.constant 0 : i32
    %c0_i32_0 = arith.constant 0 : i32
    return %arg0, %arg1, %c0_i32 : i32, i32, i32
  }
}

</mosaic_0001>

<llo_original>
// kernel: flash_attention3_forward.1
$region0: #{flash_attention3_forward.1}
  #allocation0 [shape = 'u32[]', space=smem, size = 0x4, offset = 0x4, fixed_abs, tag = 'smem constant byte address 0x4 - core index']
  #allocation1 [shape = 'u32[144,128]{1,0:T(1,128)}', space=vmem, size = 0x12000, scoped, tag = 'internal scratch']
  #allocation2 [shape = 'f32[1,256,1]{2,1,0:T(8,128)}', space=vmem, size = 0x20000, scoped, tag = 'scratch operand']
  #allocation3 [shape = 'f32[1,256,1]{2,1,0:T(8,128)}', space=vmem, size = 0x20000, scoped, tag = 'scratch operand']
  #allocation4 [shape = 'f32[1,256,128]{2,1,0:T(8,128)}', space=vmem, size = 0x20000, scoped, tag = 'scratch operand']
  %s0 = inlined_call_operand.vmem [shape: bf16[4,512,128], index: 0, kind: input, shape index: {}]
  %s1 = inlined_call_operand.vmem [shape: bf16[4,512,128], index: 1, kind: input, shape index: {}]
  %s2 = inlined_call_operand.vmem [shape: bf16[4,512,128], index: 2, kind: input, shape index: {}]
  %s3 = inlined_call_operand.vmem [shape: bf16[4,512,128], index: 3, kind: output, shape index: {}]
  %s4 = sld [smem:[#allocation0]]
  $region53: #{flash_attention3_forward.1} parent=0
    _
  %s6 = ssub.s32 1, %s4
  %s7 = scalar_select 0, %s6, %s4
  loop: start=0, step=1, limit=18
  $region2: #{flash_attention3_forward.1} parent=0 // loop_pre_header
    _
  $region3: #{flash_attention3_forward.1} parent=0 // loop_header
    %s9 = sphi 0, %s13
    %p10 = scmp.ge.s32.totalorder %s9, 18
    %s16 = sphi 0, %s35
    %s17 = sphi 0, %s31
    %s18 = sphi 0, %s27
    %s19 = sphi 0, %s16
    %s20 = sphi 0, %s17
    %s21 = sphi 0, %s18
    %s22 = sphi 0, %s19
    %s23 = sphi 0, %s20
    %s24 = sphi 0, %s21
    %s40 = sphi 0, %s42
    %s43 = sphi 0, %s40
    %s44 = sphi 0, %s43
    %s60 = sphi 0, %s44
    %s68 = sphi 0, %s70
    %s71 = sphi 0, %s68
    %s72 = sphi 0, %s71
    %s88 = sphi 0, %s72
    %s96 = sphi 0, %s98
    %s99 = sphi 0, %s96
    %s100 = sphi 0, %s99
    %s116 = sphi 0, %s100
    %s124 = sphi 0, %s126
    %s127 = sphi 0, %s124
    %s128 = sphi 0, %s127
    %s144 = sphi 0, %s128
  $region4: #{flash_attention3_forward.1} parent=0 // loop_header_branch
    %12 = sbr.rel (%p10) target = $region8
  $region5: #{flash_attention3_forward.1} parent=0 // loop_body
    %s14 = ssub.s32 %s9, 1
    %s15 = ssub.s32 %s9, 2
    %s25 = sadd.s32 1, %s18
    %p26 = scmp.ge.s32.totalorder %s25, 2
    %s27 = scalar_select %p26, 0, %s25
    %s28 = sadd.s32 1, %s17
    %s29 = scalar_select %p26, %s28, %s17
    %p30 = scmp.ge.s32.totalorder %s29, 2
    %s31 = scalar_select %p30, 0, %s29
    %s32 = sadd.s32 1, %s16
    %s33 = scalar_select %p30, %s32, %s16
    %p34 = scmp.ge.s32.totalorder %s33, 4
    %s35 = scalar_select %p34, 0, %s33
    %s36 = ssub.s32 %s16, %s35
    %s37 = ssub.s32 %s17, %s31
    %s38 = sor.u32 %s36, %s37
    %p39 = scmp.eq.s32.totalorder %s38, 0
    %s41 = sadd.s32 %s40, 1
    %s42 = scalar_select %p39, %s40, %s41
    %p45 = pneg %p39
    %p46 = scmp.eq.s32.totalorder %s9, 15
    %p47 = por %p45, %p46
    %p48 = scmp.ne.s32.totalorder %s40, %s43
    %p49 = scmp.eq.s32.totalorder %s9, 0
    %p50 = por %p48, %p49
    %p51 = scmp.ne.s32.totalorder %s40, %s43
    %p52 = scmp.eq.s32.totalorder %s14, 15
    %p53 = por %p51, %p52
    %p54 = scmp.ne.s32.totalorder %s43, %s44
    %p55 = scmp.eq.s32.totalorder %s14, 0
    %p56 = por %p54, %p55
    %p57 = scmp.ne.s32.totalorder %s43, %s44
    %p58 = scmp.eq.s32.totalorder %s15, 15
    %p59 = por %p57, %p58
    %p61 = scmp.ne.s32.totalorder %s44, %s60
    %p62 = scmp.eq.s32.totalorder %s15, 0
    %p63 = por %p61, %p62
    %s64 = ssub.s32 %s16, %s35
    %s65 = ssub.s32 %s18, %s27
    %s66 = sor.u32 %s64, %s65
    %p67 = scmp.eq.s32.totalorder %s66, 0
    %s69 = sadd.s32 %s68, 1
    %s70 = scalar_select %p67, %s68, %s69
    %p73 = pneg %p67
    %p74 = scmp.eq.s32.totalorder %s9, 15
    %p75 = por %p73, %p74
    %p76 = scmp.ne.s32.totalorder %s68, %s71
    %p77 = scmp.eq.s32.totalorder %s9, 0
    %p78 = por %p76, %p77
    %p79 = scmp.ne.s32.totalorder %s68, %s71
    %p80 = scmp.eq.s32.totalorder %s14, 15
    %p81 = por %p79, %p80
    %p82 = scmp.ne.s32.totalorder %s71, %s72
    %p83 = scmp.eq.s32.totalorder %s14, 0
    %p84 = por %p82, %p83
    %p85 = scmp.ne.s32.totalorder %s71, %s72
    %p86 = scmp.eq.s32.totalorder %s15, 15
    %p87 = por %p85, %p86
    %p89 = scmp.ne.s32.totalorder %s72, %s88
    %p90 = scmp.eq.s32.totalorder %s15, 0
    %p91 = por %p89, %p90
    %s92 = ssub.s32 %s16, %s35
    %s93 = ssub.s32 %s18, %s27
    %s94 = sor.u32 %s92, %s93
    %p95 = scmp.eq.s32.totalorder %s94, 0
    %s97 = sadd.s32 %s96, 1
    %s98 = scalar_select %p95, %s96, %s97
    %p101 = pneg %p95
    %p102 = scmp.eq.s32.totalorder %s9, 15
    %p103 = por %p101, %p102
    %p104 = scmp.ne.s32.totalorder %s96, %s99
    %p105 = scmp.eq.s32.totalorder %s9, 0
    %p106 = por %p104, %p105
    %p107 = scmp.ne.s32.totalorder %s96, %s99
    %p108 = scmp.eq.s32.totalorder %s14, 15
    %p109 = por %p107, %p108
    %p110 = scmp.ne.s32.totalorder %s99, %s100
    %p111 = scmp.eq.s32.totalorder %s14, 0
    %p112 = por %p110, %p111
    %p113 = scmp.ne.s32.totalorder %s99, %s100
    %p114 = scmp.eq.s32.totalorder %s15, 15
    %p115 = por %p113, %p114
    %p117 = scmp.ne.s32.totalorder %s100, %s116
    %p118 = scmp.eq.s32.totalorder %s15, 0
    %p119 = por %p117, %p118
    %s120 = ssub.s32 %s16, %s35
    %s121 = ssub.s32 %s17, %s31
    %s122 = sor.u32 %s120, %s121
    %p123 = scmp.eq.s32.totalorder %s122, 0
    %s125 = sadd.s32 %s124, 1
    %s126 = scalar_select %p123, %s124, %s125
    %p129 = pneg %p123
    %p130 = scmp.eq.s32.totalorder %s9, 15
    %p131 = por %p129, %p130
    %p132 = scmp.ne.s32.totalorder %s124, %s127
    %p133 = scmp.eq.s32.totalorder %s9, 0
    %p134 = por %p132, %p133
    %p135 = scmp.ne.s32.totalorder %s124, %s127
    %p136 = scmp.eq.s32.totalorder %s14, 15
    %p137 = por %p135, %p136
    %p138 = scmp.ne.s32.totalorder %s127, %s128
    %p139 = scmp.eq.s32.totalorder %s14, 0
    %p140 = por %p138, %p139
    %p141 = scmp.ne.s32.totalorder %s127, %s128
    %p142 = scmp.eq.s32.totalorder %s15, 15
    %p143 = por %p141, %p142
    %p145 = scmp.ne.s32.totalorder %s128, %s144
    %p146 = scmp.eq.s32.totalorder %s15, 0
    %p147 = por %p145, %p146
    %p148 = scmp.le.s32.totalorder 1, %s9
    %p149 = scmp.lt.s32.totalorder %s9, 17
    %p150 = pnand %p148, %p149
    %p151 = pneg %p150
    // Predicated region
    $region9: #{flash_attention3_forward.1} parent=5 // pred_check
      _
    $region10: #{flash_attention3_forward.1} parent=5 // pred_check_branch
      %153 = sbr.rel (%p150) target = $region12
    $region11: #{flash_attention3_forward.1} parent=5 // pred_region
      %s154 = ssub.s32 %s9, 1
    $region12: #{flash_attention3_forward.1} parent=5 // pred_fallthru
      _
    %p155 = scmp.lt.s32.totalorder %s9, 16
    // Predicated region
    $region13: #{flash_attention3_forward.1} parent=5 // pred_check
      %p156 = pneg %p155
    $region14: #{flash_attention3_forward.1} parent=5 // pred_check_branch
      %158 = sbr.rel (%p156) target = $region16
    $region15: #{flash_attention3_forward.1} parent=5 // pred_region
      // Predicated region
      $region17: #{flash_attention3_forward.1} parent=15 // pred_check
        %p159 = pneg %p50
      $region18: #{flash_attention3_forward.1} parent=15 // pred_check_branch
        %161 = sbr.rel (%p159) target = $region20
      $region19: #{flash_attention3_forward.1} parent=15 // pred_region
        %s162 = smul.u32 32, %s17
        %p163 = scmp.lt.s32.totalorder %s16, 3
        %s164 = scalar_select %p163, %s16, 3
        %p165 = scmp.lt.s32.totalorder %s162, 63
        %s166 = scalar_select %p165, %s162, 63
        %s167 = smul.addr %s164, 64
        %s168 = sadd.s32 %s166, %s167
        %s169 = smul.addr %s168, 4
        %s170 = scalar_lea.vmem %s0, %s169
        %s171 = smul.u32 32, %s17
      $region20: #{flash_attention3_forward.1} parent=15 // pred_fallthru
        _
      // Predicated region
      $region21: #{flash_attention3_forward.1} parent=15 // pred_check
        %p172 = pneg %p78
      $region22: #{flash_attention3_forward.1} parent=15 // pred_check_branch
        %174 = sbr.rel (%p172) target = $region24
      $region23: #{flash_attention3_forward.1} parent=15 // pred_region
        %s175 = smul.u32 32, %s18
        %p176 = scmp.lt.s32.totalorder %s16, 3
        %s177 = scalar_select %p176, %s16, 3
        %p178 = scmp.lt.s32.totalorder %s175, 63
        %s179 = scalar_select %p178, %s175, 63
        %s180 = smul.addr %s177, 64
        %s181 = sadd.s32 %s179, %s180
        %s182 = smul.addr %s181, 4
        %s183 = scalar_lea.vmem %s1, %s182
        %s184 = smul.u32 32, %s18
      $region24: #{flash_attention3_forward.1} parent=15 // pred_fallthru
        _
      // Predicated region
      $region25: #{flash_attention3_forward.1} parent=15 // pred_check
        %p185 = pneg %p106
      $region26: #{flash_attention3_forward.1} parent=15 // pred_check_branch
        %187 = sbr.rel (%p185) target = $region28
      $region27: #{flash_attention3_forward.1} parent=15 // pred_region
        %s188 = smul.u32 32, %s18
        %p189 = scmp.lt.s32.totalorder %s16, 3
        %s190 = scalar_select %p189, %s16, 3
        %p191 = scmp.lt.s32.totalorder %s188, 63
        %s192 = scalar_select %p191, %s188, 63
        %s193 = smul.addr %s190, 64
        %s194 = sadd.s32 %s192, %s193
        %s195 = smul.addr %s194, 4
        %s196 = scalar_lea.vmem %s2, %s195
        %s197 = smul.u32 32, %s18
      $region28: #{flash_attention3_forward.1} parent=15 // pred_fallthru
        _
    $region16: #{flash_attention3_forward.1} parent=5 // pred_fallthru
      _
    %p198 = scmp.le.s32.totalorder 1, %s9
    %p199 = scmp.lt.s32.totalorder %s9, 17
    %p200 = pnand %p198, %p199
    %p201 = pneg %p200
    // Predicated region
    $region29: #{flash_attention3_forward.1} parent=5 // pred_check
      _
    $region30: #{flash_attention3_forward.1} parent=5 // pred_check_branch
      %203 = sbr.rel (%p200) target = $region32
    $region31: #{flash_attention3_forward.1} parent=5 // pred_region
      %s204 = ssub.s32 %s9, 1
      %s205 = smul.u32 32, %s20
      %p206 = scmp.lt.s32.totalorder %s19, 3
      %s207 = scalar_select %p206, %s19, 3
      %p208 = scmp.lt.s32.totalorder %s205, 63
      %s209 = scalar_select %p208, %s205, 63
      %s210 = smul.addr %s207, 64
      %s211 = sadd.s32 %s209, %s210
      %s212 = smul.addr %s211, 4
      %s213 = scalar_lea.vmem %s0, %s212
      %p214 = pneg %p56
      %p215 = pneg %p53
      %s216 = smul.u32 32, %s21
      %p217 = scmp.lt.s32.totalorder %s19, 3
      %s218 = scalar_select %p217, %s19, 3
      %p219 = scmp.lt.s32.totalorder %s216, 63
      %s220 = scalar_select %p219, %s216, 63
      %s221 = smul.addr %s218, 64
      %s222 = sadd.s32 %s220, %s221
      %s223 = smul.addr %s222, 4
      %s224 = scalar_lea.vmem %s1, %s223
      %p225 = pneg %p84
      %p226 = pneg %p81
      %s227 = smul.u32 32, %s21
      %p228 = scmp.lt.s32.totalorder %s19, 3
      %s229 = scalar_select %p228, %s19, 3
      %p230 = scmp.lt.s32.totalorder %s227, 63
      %s231 = scalar_select %p230, %s227, 63
      %s232 = smul.addr %s229, 64
      %s233 = sadd.s32 %s231, %s232
      %s234 = smul.addr %s233, 4
      %s235 = scalar_lea.vmem %s2, %s234
      %p236 = pneg %p112
      %p237 = pneg %p109
      %p238 = pneg %p140
      %p239 = pneg %p137
      %s240 = smul.u32 32, %s20
      %p241 = scmp.lt.s32.totalorder %s19, 3
      %s242 = scalar_select %p241, %s19, 3
      %p243 = scmp.lt.s32.totalorder %s240, 63
      %s244 = scalar_select %p243, %s240, 63
      %s245 = smul.addr %s242, 64
      %s246 = sadd.s32 %s244, %s245
      %s247 = smul.addr %s246, 4
      %s248 = scalar_lea.vmem %s3, %s247
      %s249 = smul.u32 32, %s20
      %p250 = scmp.lt.s32.totalorder %s19, 3
      %s251 = scalar_select %p250, %s19, 3
      %p252 = scmp.lt.s32.totalorder %s249, 63
      %s253 = scalar_select %p252, %s249, 63
      %s254 = smul.addr %s251, 64
      %s255 = sadd.s32 %s253, %s254
      %s256 = smul.addr %s255, 4
      %s257 = scalar_lea.vmem %s0, %s256
      %s258 = smul.u32 32, %s20
      %s259 = smul.u32 32, %s21
      %p260 = scmp.lt.s32.totalorder %s19, 3
      %s261 = scalar_select %p260, %s19, 3
      %p262 = scmp.lt.s32.totalorder %s259, 63
      %s263 = scalar_select %p262, %s259, 63
      %s264 = smul.addr %s261, 64
      %s265 = sadd.s32 %s263, %s264
      %s266 = smul.addr %s265, 4
      %s267 = scalar_lea.vmem %s1, %s266
      %s268 = smul.u32 32, %s21
      %s269 = smul.u32 32, %s21
      %p270 = scmp.lt.s32.totalorder %s19, 3
      %s271 = scalar_select %p270, %s19, 3
      %p272 = scmp.lt.s32.totalorder %s269, 63
      %s273 = scalar_select %p272, %s269, 63
      %s274 = smul.addr %s271, 64
      %s275 = sadd.s32 %s273, %s274
      %s276 = smul.addr %s275, 4
      %s277 = scalar_lea.vmem %s2, %s276
      %s278 = smul.u32 32, %s21
      %s279 = smul.u32 32, %s20
      %p280 = scmp.lt.s32.totalorder %s19, 3
      %s281 = scalar_select %p280, %s19, 3
      %p282 = scmp.lt.s32.totalorder %s279, 63
      %s283 = scalar_select %p282, %s279, 63
      %s284 = smul.addr %s281, 64
      %s285 = sadd.s32 %s283, %s284
      %s286 = smul.addr %s285, 4
      %s287 = scalar_lea.vmem %s3, %s286
      %s288 = smul.u32 32, %s20
      %p290 = scmp.eq.s32.totalorder %s21, 0
      // Predicated region
      $region33: #{flash_attention3_forward.1} parent=31 // pred_check
        %p291 = pneg %p290
      $region34: #{flash_attention3_forward.1} parent=31 // pred_check_branch
        %293 = sbr.rel (%p291) target = $region36
      $region35: #{flash_attention3_forward.1} parent=31 // pred_region
        %vm294 = vcmask 7168
        %295 = vst.msk [vmem:[#allocation2] sm:$0xff] %vm294, -inf
        %296 = vst.msk [vmem:[#allocation2 + $0x8] sm:$0xff] %vm294, -inf
        %297 = vst.msk [vmem:[#allocation2 + $0x10] sm:$0xff] %vm294, -inf
        %298 = vst.msk [vmem:[#allocation2 + $0x18] sm:$0xff] %vm294, -inf
        %299 = vst.msk [vmem:[#allocation2 + $0x20] sm:$0xff] %vm294, -inf
        %300 = vst.msk [vmem:[#allocation2 + $0x28] sm:$0xff] %vm294, -inf
        %301 = vst.msk [vmem:[#allocation2 + $0x30] sm:$0xff] %vm294, -inf
        %302 = vst.msk [vmem:[#allocation2 + $0x38] sm:$0xff] %vm294, -inf
        %303 = vst.msk [vmem:[#allocation2 + $0x40] sm:$0xff] %vm294, -inf
        %304 = vst.msk [vmem:[#allocation2 + $0x48] sm:$0xff] %vm294, -inf
        %305 = vst.msk [vmem:[#allocation2 + $0x50] sm:$0xff] %vm294, -inf
        %306 = vst.msk [vmem:[#allocation2 + $0x58] sm:$0xff] %vm294, -inf
        %307 = vst.msk [vmem:[#allocation2 + $0x60] sm:$0xff] %vm294, -inf
        %308 = vst.msk [vmem:[#allocation2 + $0x68] sm:$0xff] %vm294, -inf
        %309 = vst.msk [vmem:[#allocation2 + $0x70] sm:$0xff] %vm294, -inf
        %310 = vst.msk [vmem:[#allocation2 + $0x78] sm:$0xff] %vm294, -inf
        %311 = vst.msk [vmem:[#allocation2 + $0x80] sm:$0xff] %vm294, -inf
        %312 = vst.msk [vmem:[#allocation2 + $0x88] sm:$0xff] %vm294, -inf
        %313 = vst.msk [vmem:[#allocation2 + $0x90] sm:$0xff] %vm294, -inf
        %314 = vst.msk [vmem:[#allocation2 + $0x98] sm:$0xff] %vm294, -inf
        %315 = vst.msk [vmem:[#allocation2 + $0xa0] sm:$0xff] %vm294, -inf
        %316 = vst.msk [vmem:[#allocation2 + $0xa8] sm:$0xff] %vm294, -inf
        %317 = vst.msk [vmem:[#allocation2 + $0xb0] sm:$0xff] %vm294, -inf
        %318 = vst.msk [vmem:[#allocation2 + $0xb8] sm:$0xff] %vm294, -inf
        %319 = vst.msk [vmem:[#allocation2 + $0xc0] sm:$0xff] %vm294, -inf
        %320 = vst.msk [vmem:[#allocation2 + $0xc8] sm:$0xff] %vm294, -inf
        %321 = vst.msk [vmem:[#allocation2 + $0xd0] sm:$0xff] %vm294, -inf
        %322 = vst.msk [vmem:[#allocation2 + $0xd8] sm:$0xff] %vm294, -inf
        %323 = vst.msk [vmem:[#allocation2 + $0xe0] sm:$0xff] %vm294, -inf
        %324 = vst.msk [vmem:[#allocation2 + $0xe8] sm:$0xff] %vm294, -inf
        %325 = vst.msk [vmem:[#allocation2 + $0xf0] sm:$0xff] %vm294, -inf
        %326 = vst.msk [vmem:[#allocation2 + $0xf8] sm:$0xff] %vm294, -inf
        %327 = vst.msk [vmem:[#allocation3] sm:$0xff] %vm294, 0.0
        %328 = vst.msk [vmem:[#allocation3 + $0x8] sm:$0xff] %vm294, 0.0
        %329 = vst.msk [vmem:[#allocation3 + $0x10] sm:$0xff] %vm294, 0.0
        %330 = vst.msk [vmem:[#allocation3 + $0x18] sm:$0xff] %vm294, 0.0
        %331 = vst.msk [vmem:[#allocation3 + $0x20] sm:$0xff] %vm294, 0.0
        %332 = vst.msk [vmem:[#allocation3 + $0x28] sm:$0xff] %vm294, 0.0
        %333 = vst.msk [vmem:[#allocation3 + $0x30] sm:$0xff] %vm294, 0.0
        %334 = vst.msk [vmem:[#allocation3 + $0x38] sm:$0xff] %vm294, 0.0
        %335 = vst.msk [vmem:[#allocation3 + $0x40] sm:$0xff] %vm294, 0.0
        %336 = vst.msk [vmem:[#allocation3 + $0x48] sm:$0xff] %vm294, 0.0
        %337 = vst.msk [vmem:[#allocation3 + $0x50] sm:$0xff] %vm294, 0.0
        %338 = vst.msk [vmem:[#allocation3 + $0x58] sm:$0xff] %vm294, 0.0
        %339 = vst.msk [vmem:[#allocation3 + $0x60] sm:$0xff] %vm294, 0.0
        %340 = vst.msk [vmem:[#allocation3 + $0x68] sm:$0xff] %vm294, 0.0
        %341 = vst.msk [vmem:[#allocation3 + $0x70] sm:$0xff] %vm294, 0.0
        %342 = vst.msk [vmem:[#allocation3 + $0x78] sm:$0xff] %vm294, 0.0
        %343 = vst.msk [vmem:[#allocation3 + $0x80] sm:$0xff] %vm294, 0.0
        %344 = vst.msk [vmem:[#allocation3 + $0x88] sm:$0xff] %vm294, 0.0
        %345 = vst.msk [vmem:[#allocation3 + $0x90] sm:$0xff] %vm294, 0.0
        %346 = vst.msk [vmem:[#allocation3 + $0x98] sm:$0xff] %vm294, 0.0
        %347 = vst.msk [vmem:[#allocation3 + $0xa0] sm:$0xff] %vm294, 0.0
        %348 = vst.msk [vmem:[#allocation3 + $0xa8] sm:$0xff] %vm294, 0.0
        %349 = vst.msk [vmem:[#allocation3 + $0xb0] sm:$0xff] %vm294, 0.0
        %350 = vst.msk [vmem:[#allocation3 + $0xb8] sm:$0xff] %vm294, 0.0
        %351 = vst.msk [vmem:[#allocation3 + $0xc0] sm:$0xff] %vm294, 0.0
        %352 = vst.msk [vmem:[#allocation3 + $0xc8] sm:$0xff] %vm294, 0.0
        %353 = vst.msk [vmem:[#allocation3 + $0xd0] sm:$0xff] %vm294, 0.0
        %354 = vst.msk [vmem:[#allocation3 + $0xd8] sm:$0xff] %vm294, 0.0
        %355 = vst.msk [vmem:[#allocation3 + $0xe0] sm:$0xff] %vm294, 0.0
        %356 = vst.msk [vmem:[#allocation3 + $0xe8] sm:$0xff] %vm294, 0.0
        %357 = vst.msk [vmem:[#allocation3 + $0xf0] sm:$0xff] %vm294, 0.0
        %358 = vst.msk [vmem:[#allocation3 + $0xf8] sm:$0xff] %vm294, 0.0
        %359 = vst [vmem:[#allocation4] sm:$0xff] 0.0
        %360 = vst [vmem:[#allocation4 + $0x8] sm:$0xff] 0.0
        %361 = vst [vmem:[#allocation4 + $0x10] sm:$0xff] 0.0
        %362 = vst [vmem:[#allocation4 + $0x18] sm:$0xff] 0.0
        %363 = vst [vmem:[#allocation4 + $0x20] sm:$0xff] 0.0
        %364 = vst [vmem:[#allocation4 + $0x28] sm:$0xff] 0.0
        %365 = vst [vmem:[#allocation4 + $0x30] sm:$0xff] 0.0
        %366 = vst [vmem:[#allocation4 + $0x38] sm:$0xff] 0.0
        %367 = vst [vmem:[#allocation4 + $0x40] sm:$0xff] 0.0
        %368 = vst [vmem:[#allocation4 + $0x48] sm:$0xff] 0.0
        %369 = vst [vmem:[#allocation4 + $0x50] sm:$0xff] 0.0
        %370 = vst [vmem:[#allocation4 + $0x58] sm:$0xff] 0.0
        %371 = vst [vmem:[#allocation4 + $0x60] sm:$0xff] 0.0
        %372 = vst [vmem:[#allocation4 + $0x68] sm:$0xff] 0.0
        %373 = vst [vmem:[#allocation4 + $0x70] sm:$0xff] 0.0
        %374 = vst [vmem:[#allocation4 + $0x78] sm:$0xff] 0.0
        %375 = vst [vmem:[#allocation4 + $0x80] sm:$0xff] 0.0
        %376 = vst [vmem:[#allocation4 + $0x88] sm:$0xff] 0.0
        %377 = vst [vmem:[#allocation4 + $0x90] sm:$0xff] 0.0
        %378 = vst [vmem:[#allocation4 + $0x98] sm:$0xff] 0.0
        %379 = vst [vmem:[#allocation4 + $0xa0] sm:$0xff] 0.0
        %380 = vst [vmem:[#allocation4 + $0xa8] sm:$0xff] 0.0
        %381 = vst [vmem:[#allocation4 + $0xb0] sm:$0xff] 0.0
        %382 = vst [vmem:[#allocation4 + $0xb8] sm:$0xff] 0.0
        %383 = vst [vmem:[#allocation4 + $0xc0] sm:$0xff] 0.0
        %384 = vst [vmem:[#allocation4 + $0xc8] sm:$0xff] 0.0
        %385 = vst [vmem:[#allocation4 + $0xd0] sm:$0xff] 0.0
        %386 = vst [vmem:[#allocation4 + $0xd8] sm:$0xff] 0.0
        %387 = vst [vmem:[#allocation4 + $0xe0] sm:$0xff] 0.0
        %388 = vst [vmem:[#allocation4 + $0xe8] sm:$0xff] 0.0
        %389 = vst [vmem:[#allocation4 + $0xf0] sm:$0xff] 0.0
        %390 = vst [vmem:[#allocation4 + $0xf8] sm:$0xff] 0.0
      $region36: #{flash_attention3_forward.1} parent=31 // pred_fallthru
        _
      %v391 = vld [vmem:[%s257] sm:$0xf]
      %v392 = vld [vmem:[%s257 + $0x4] sm:$0xf]
      %v393 = vld [vmem:[%s257 + $0x8] sm:$0xf]
      %v394 = vld [vmem:[%s257 + $0xc] sm:$0xf]
      %v395 = vld [vmem:[%s257 + $0x10] sm:$0xf]
      %v396 = vld [vmem:[%s257 + $0x14] sm:$0xf]
      %v397 = vld [vmem:[%s257 + $0x18] sm:$0xf]
      %v398 = vld [vmem:[%s257 + $0x1c] sm:$0xf]
      %v399 = vld [vmem:[%s257 + $0x20] sm:$0xf]
      %v400 = vld [vmem:[%s257 + $0x24] sm:$0xf]
      %v401 = vld [vmem:[%s257 + $0x28] sm:$0xf]
      %v402 = vld [vmem:[%s257 + $0x2c] sm:$0xf]
      %v403 = vld [vmem:[%s257 + $0x30] sm:$0xf]
      %v404 = vld [vmem:[%s257 + $0x34] sm:$0xf]
      %v405 = vld [vmem:[%s257 + $0x38] sm:$0xf]
      %v406 = vld [vmem:[%s257 + $0x3c] sm:$0xf]
      %v407 = vld [vmem:[%s257 + $0x40] sm:$0xf]
      %v408 = vld [vmem:[%s257 + $0x44] sm:$0xf]
      %v409 = vld [vmem:[%s257 + $0x48] sm:$0xf]
      %v410 = vld [vmem:[%s257 + $0x4c] sm:$0xf]
      %v411 = vld [vmem:[%s257 + $0x50] sm:$0xf]
      %v412 = vld [vmem:[%s257 + $0x54] sm:$0xf]
      %v413 = vld [vmem:[%s257 + $0x58] sm:$0xf]
      %v414 = vld [vmem:[%s257 + $0x5c] sm:$0xf]
      %v415 = vld [vmem:[%s257 + $0x60] sm:$0xf]
      %v416 = vld [vmem:[%s257 + $0x64] sm:$0xf]
      %v417 = vld [vmem:[%s257 + $0x68] sm:$0xf]
      %v418 = vld [vmem:[%s257 + $0x6c] sm:$0xf]
      %v419 = vld [vmem:[%s257 + $0x70] sm:$0xf]
      %v420 = vld [vmem:[%s257 + $0x74] sm:$0xf]
      %v421 = vld [vmem:[%s257 + $0x78] sm:$0xf]
      %v422 = vld [vmem:[%s257 + $0x7c] sm:$0xf]
      %v423 = vld [vmem:[%s267] sm:$0xf]
      %v424 = vld [vmem:[%s267 + $0x4] sm:$0xf]
      %v425 = vld [vmem:[%s267 + $0x8] sm:$0xf]
      %v426 = vld [vmem:[%s267 + $0xc] sm:$0xf]
      %v427 = vld [vmem:[%s267 + $0x10] sm:$0xf]
      %v428 = vld [vmem:[%s267 + $0x14] sm:$0xf]
      %v429 = vld [vmem:[%s267 + $0x18] sm:$0xf]
      %v430 = vld [vmem:[%s267 + $0x1c] sm:$0xf]
      %v431 = vld [vmem:[%s267 + $0x20] sm:$0xf]
      %v432 = vld [vmem:[%s267 + $0x24] sm:$0xf]
      %v433 = vld [vmem:[%s267 + $0x28] sm:$0xf]
      %v434 = vld [vmem:[%s267 + $0x2c] sm:$0xf]
      %v435 = vld [vmem:[%s267 + $0x30] sm:$0xf]
      %v436 = vld [vmem:[%s267 + $0x34] sm:$0xf]
      %v437 = vld [vmem:[%s267 + $0x38] sm:$0xf]
      %v438 = vld [vmem:[%s267 + $0x3c] sm:$0xf]
      %v439 = vld [vmem:[%s267 + $0x40] sm:$0xf]
      %v440 = vld [vmem:[%s267 + $0x44] sm:$0xf]
      %v441 = vld [vmem:[%s267 + $0x48] sm:$0xf]
      %v442 = vld [vmem:[%s267 + $0x4c] sm:$0xf]
      %v443 = vld [vmem:[%s267 + $0x50] sm:$0xf]
      %v444 = vld [vmem:[%s267 + $0x54] sm:$0xf]
      %v445 = vld [vmem:[%s267 + $0x58] sm:$0xf]
      %v446 = vld [vmem:[%s267 + $0x5c] sm:$0xf]
      %v447 = vld [vmem:[%s267 + $0x60] sm:$0xf]
      %v448 = vld [vmem:[%s267 + $0x64] sm:$0xf]
      %v449 = vld [vmem:[%s267 + $0x68] sm:$0xf]
      %v450 = vld [vmem:[%s267 + $0x6c] sm:$0xf]
      %v451 = vld [vmem:[%s267 + $0x70] sm:$0xf]
      %v452 = vld [vmem:[%s267 + $0x74] sm:$0xf]
      %v453 = vld [vmem:[%s267 + $0x78] sm:$0xf]
      %v454 = vld [vmem:[%s267 + $0x7c] sm:$0xf]
      %v455 = vld [vmem:[%s277] sm:$0xf]
      %v456 = vld [vmem:[%s277 + $0x4] sm:$0xf]
      %v457 = vld [vmem:[%s277 + $0x8] sm:$0xf]
      %v458 = vld [vmem:[%s277 + $0xc] sm:$0xf]
      %v459 = vld [vmem:[%s277 + $0x10] sm:$0xf]
      %v460 = vld [vmem:[%s277 + $0x14] sm:$0xf]
      %v461 = vld [vmem:[%s277 + $0x18] sm:$0xf]
      %v462 = vld [vmem:[%s277 + $0x1c] sm:$0xf]
      %v463 = vld [vmem:[%s277 + $0x20] sm:$0xf]
      %v464 = vld [vmem:[%s277 + $0x24] sm:$0xf]
      %v465 = vld [vmem:[%s277 + $0x28] sm:$0xf]
      %v466 = vld [vmem:[%s277 + $0x2c] sm:$0xf]
      %v467 = vld [vmem:[%s277 + $0x30] sm:$0xf]
      %v468 = vld [vmem:[%s277 + $0x34] sm:$0xf]
      %v469 = vld [vmem:[%s277 + $0x38] sm:$0xf]
      %v470 = vld [vmem:[%s277 + $0x3c] sm:$0xf]
      %v471 = vld [vmem:[%s277 + $0x40] sm:$0xf]
      %v472 = vld [vmem:[%s277 + $0x44] sm:$0xf]
      %v473 = vld [vmem:[%s277 + $0x48] sm:$0xf]
      %v474 = vld [vmem:[%s277 + $0x4c] sm:$0xf]
      %v475 = vld [vmem:[%s277 + $0x50] sm:$0xf]
      %v476 = vld [vmem:[%s277 + $0x54] sm:$0xf]
      %v477 = vld [vmem:[%s277 + $0x58] sm:$0xf]
      %v478 = vld [vmem:[%s277 + $0x5c] sm:$0xf]
      %v479 = vld [vmem:[%s277 + $0x60] sm:$0xf]
      %v480 = vld [vmem:[%s277 + $0x64] sm:$0xf]
      %v481 = vld [vmem:[%s277 + $0x68] sm:$0xf]
      %v482 = vld [vmem:[%s277 + $0x6c] sm:$0xf]
      %v483 = vld [vmem:[%s277 + $0x70] sm:$0xf]
      %v484 = vld [vmem:[%s277 + $0x74] sm:$0xf]
      %v485 = vld [vmem:[%s277 + $0x78] sm:$0xf]
      %v486 = vld [vmem:[%s277 + $0x7c] sm:$0xf]
      %v519 = vunpack.c.l.b16 %v391
      %v520 = vunpack.c.l.b16 %v392
      %v521 = vunpack.c.l.b16 %v393
      %v522 = vunpack.c.l.b16 %v394
      %v523 = vunpack.c.l.b16 %v395
      %v524 = vunpack.c.l.b16 %v396
      %v525 = vunpack.c.l.b16 %v397
      %v526 = vunpack.c.l.b16 %v398
      %v527 = vunpack.c.l.b16 %v399
      %v528 = vunpack.c.l.b16 %v400
      %v529 = vunpack.c.l.b16 %v401
      %v530 = vunpack.c.l.b16 %v402
      %v531 = vunpack.c.l.b16 %v403
      %v532 = vunpack.c.l.b16 %v404
      %v533 = vunpack.c.l.b16 %v405
      %v534 = vunpack.c.l.b16 %v406
      %v535 = vunpack.c.l.b16 %v407
      %v536 = vunpack.c.l.b16 %v408
      %v537 = vunpack.c.l.b16 %v409
      %v538 = vunpack.c.l.b16 %v410
      %v539 = vunpack.c.l.b16 %v411
      %v540 = vunpack.c.l.b16 %v412
      %v541 = vunpack.c.l.b16 %v413
      %v542 = vunpack.c.l.b16 %v414
      %v543 = vunpack.c.l.b16 %v415
      %v544 = vunpack.c.l.b16 %v416
      %v545 = vunpack.c.l.b16 %v417
      %v546 = vunpack.c.l.b16 %v418
      %v547 = vunpack.c.l.b16 %v419
      %v548 = vunpack.c.l.b16 %v420
      %v549 = vunpack.c.l.b16 %v421
      %v550 = vunpack.c.l.b16 %v422
      %v551 = vpack.c.b16 %v520, %v519
      %v552 = vpack.c.b16 %v522, %v521
      %v553 = vpack.c.b16 %v524, %v523
      %v554 = vpack.c.b16 %v526, %v525
      %v555 = vpack.c.b16 %v528, %v527
      %v556 = vpack.c.b16 %v530, %v529
      %v557 = vpack.c.b16 %v532, %v531
      %v558 = vpack.c.b16 %v534, %v533
      %v559 = vpack.c.b16 %v536, %v535
      %v560 = vpack.c.b16 %v538, %v537
      %v561 = vpack.c.b16 %v540, %v539
      %v562 = vpack.c.b16 %v542, %v541
      %v563 = vpack.c.b16 %v544, %v543
      %v564 = vpack.c.b16 %v546, %v545
      %v565 = vpack.c.b16 %v548, %v547
      %v566 = vpack.c.b16 %v550, %v549
      %v615 = vunpack.c.l.b16 %v423
      %v616 = vunpack.c.l.b16 %v424
      %v617 = vunpack.c.l.b16 %v425
      %v618 = vunpack.c.l.b16 %v426
      %v619 = vunpack.c.l.b16 %v427
      %v620 = vunpack.c.l.b16 %v428
      %v621 = vunpack.c.l.b16 %v429
      %v622 = vunpack.c.l.b16 %v430
      %v623 = vunpack.c.l.b16 %v431
      %v624 = vunpack.c.l.b16 %v432
      %v625 = vunpack.c.l.b16 %v433
      %v626 = vunpack.c.l.b16 %v434
      %v627 = vunpack.c.l.b16 %v435
      %v628 = vunpack.c.l.b16 %v436
      %v629 = vunpack.c.l.b16 %v437
      %v630 = vunpack.c.l.b16 %v438
      %v631 = vunpack.c.l.b16 %v439
      %v632 = vunpack.c.l.b16 %v440
      %v633 = vunpack.c.l.b16 %v441
      %v634 = vunpack.c.l.b16 %v442
      %v635 = vunpack.c.l.b16 %v443
      %v636 = vunpack.c.l.b16 %v444
      %v637 = vunpack.c.l.b16 %v445
      %v638 = vunpack.c.l.b16 %v446
      %v639 = vunpack.c.l.b16 %v447
      %v640 = vunpack.c.l.b16 %v448
      %v641 = vunpack.c.l.b16 %v449
      %v642 = vunpack.c.l.b16 %v450
      %v643 = vunpack.c.l.b16 %v451
      %v644 = vunpack.c.l.b16 %v452
      %v645 = vunpack.c.l.b16 %v453
      %v646 = vunpack.c.l.b16 %v454
      %v647 = vpack.c.b16 %v616, %v615
      %v648 = vpack.c.b16 %v618, %v617
      %v649 = vpack.c.b16 %v620, %v619
      %v650 = vpack.c.b16 %v622, %v621
      %v651 = vpack.c.b16 %v624, %v623
      %v652 = vpack.c.b16 %v626, %v625
      %v653 = vpack.c.b16 %v628, %v627
      %v654 = vpack.c.b16 %v630, %v629
      %v655 = vpack.c.b16 %v632, %v631
      %v656 = vpack.c.b16 %v634, %v633
      %v657 = vpack.c.b16 %v636, %v635
      %v658 = vpack.c.b16 %v638, %v637
      %v659 = vpack.c.b16 %v640, %v639
      %v660 = vpack.c.b16 %v642, %v641
      %v661 = vpack.c.b16 %v644, %v643
      %v662 = vpack.c.b16 %v646, %v645
      %679 = vmatprep.subr.bf16.mxu0 0
      %680 = vmatpush1.bf16.xpose.msra.mxu0 %v654
      %681 = vmatprep.subr.bf16.mxu0 0
      %682 = vmatpush1.bf16.xpose.msra.mxu0 %v653
      %683 = vmatprep.subr.bf16.mxu0 0
      %684 = vmatpush1.bf16.xpose.msra.mxu0 %v652
      %685 = vmatprep.subr.bf16.mxu0 0
      %686 = vmatpush1.bf16.xpose.msra.mxu0 %v651
      %687 = vmatprep.subr.bf16.mxu0 0
      %688 = vmatpush1.bf16.xpose.msra.mxu0 %v650
      %689 = vmatprep.subr.bf16.mxu0 0
      %690 = vmatpush1.bf16.xpose.msra.mxu0 %v649
      %691 = vmatprep.subr.bf16.mxu0 0
      %692 = vmatpush1.bf16.xpose.msra.mxu0 %v648
      %693 = vmatprep.subr.bf16.mxu0 0
      %694 = vmatpush1.bf16.xpose.msra.mxu0 %v647
      %695 = vmatprep.subr.bf16.mxu0 0
      %696 = vmatpush2.bf16.xpose.msra.mxu0 %v662
      %697 = vmatprep.subr.bf16.mxu0 0
      %698 = vmatpush2.bf16.xpose.msra.mxu0 %v661
      %699 = vmatprep.subr.bf16.mxu0 0
      %700 = vmatpush2.bf16.xpose.msra.mxu0 %v660
      %701 = vmatprep.subr.bf16.mxu0 0
      %702 = vmatpush2.bf16.xpose.msra.mxu0 %v659
      %703 = vmatprep.subr.bf16.mxu0 0
      %704 = vmatpush2.bf16.xpose.msra.mxu0 %v658
      %705 = vmatprep.subr.bf16.mxu0 0
      %706 = vmatpush2.bf16.xpose.msra.mxu0 %v657
      %707 = vmatprep.subr.bf16.mxu0 0
      %708 = vmatpush2.bf16.xpose.msra.mxu0 %v656
      %709 = vmatprep.subr.bf16.mxu0 0
      %710 = vmatpush2.bf16.xpose.msra.mxu0 %v655
      %711 = vmatprep.mubr.bf16.mxu0 0
      %712 = vmatmul.mubr.bf16.gmra.mxu0 %v551
      %v713 = vpop.f32.mrf.mxu0
      %v714 = vadd.f32 0.0, %v713
      %v715 = vpop.f32.mrf.mxu0
      %v716 = vadd.f32 0.0, %v715
      %v717 = vpop.f32.mrf.mxu0
      %v718 = vadd.f32 0.0, %v717
      %v719 = vpop.f32.mrf.mxu0
      %v720 = vadd.f32 0.0, %v719
      %721 = vmatprep.mubr.bf16.mxu0 0
      %722 = vmatmul.mubr.bf16.gmra.mxu0 %v552
      %v723 = vpop.f32.mrf.mxu0
      %v724 = vadd.f32 0.0, %v723
      %v725 = vpop.f32.mrf.mxu0
      %v726 = vadd.f32 0.0, %v725
      %v727 = vpop.f32.mrf.mxu0
      %v728 = vadd.f32 0.0, %v727
      %v729 = vpop.f32.mrf.mxu0
      %v730 = vadd.f32 0.0, %v729
      %731 = vmatprep.mubr.bf16.mxu0 0
      %732 = vmatmul.mubr.bf16.gmra.mxu0 %v553
      %v733 = vpop.f32.mrf.mxu0
      %v734 = vadd.f32 0.0, %v733
      %v735 = vpop.f32.mrf.mxu0
      %v736 = vadd.f32 0.0, %v735
      %v737 = vpop.f32.mrf.mxu0
      %v738 = vadd.f32 0.0, %v737
      %v739 = vpop.f32.mrf.mxu0
      %v740 = vadd.f32 0.0, %v739
      %741 = vmatprep.mubr.bf16.mxu0 0
      %742 = vmatmul.mubr.bf16.gmra.mxu0 %v554
      %v743 = vpop.f32.mrf.mxu0
      %v744 = vadd.f32 0.0, %v743
      %v745 = vpop.f32.mrf.mxu0
      %v746 = vadd.f32 0.0, %v745
      %v747 = vpop.f32.mrf.mxu0
      %v748 = vadd.f32 0.0, %v747
      %v749 = vpop.f32.mrf.mxu0
      %v750 = vadd.f32 0.0, %v749
      %751 = vmatprep.mubr.bf16.mxu0 0
      %752 = vmatmul.mubr.bf16.gmra.mxu0 %v555
      %v753 = vpop.f32.mrf.mxu0
      %v754 = vadd.f32 0.0, %v753
      %v755 = vpop.f32.mrf.mxu0
      %v756 = vadd.f32 0.0, %v755
      %v757 = vpop.f32.mrf.mxu0
      %v758 = vadd.f32 0.0, %v757
      %v759 = vpop.f32.mrf.mxu0
      %v760 = vadd.f32 0.0, %v759
      %761 = vmatprep.mubr.bf16.mxu0 0
      %762 = vmatmul.mubr.bf16.gmra.mxu0 %v556
      %v763 = vpop.f32.mrf.mxu0
      %v764 = vadd.f32 0.0, %v763
      %v765 = vpop.f32.mrf.mxu0
      %v766 = vadd.f32 0.0, %v765
      %v767 = vpop.f32.mrf.mxu0
      %v768 = vadd.f32 0.0, %v767
      %v769 = vpop.f32.mrf.mxu0
      %v770 = vadd.f32 0.0, %v769
      %771 = vmatprep.mubr.bf16.mxu0 0
      %772 = vmatmul.mubr.bf16.gmra.mxu0 %v557
      %v773 = vpop.f32.mrf.mxu0
      %v774 = vadd.f32 0.0, %v773
      %v775 = vpop.f32.mrf.mxu0
      %v776 = vadd.f32 0.0, %v775
      %v777 = vpop.f32.mrf.mxu0
      %v778 = vadd.f32 0.0, %v777
      %v779 = vpop.f32.mrf.mxu0
      %v780 = vadd.f32 0.0, %v779
      %781 = vmatprep.mubr.bf16.mxu0 0
      %782 = vmatmul.mubr.bf16.gmra.mxu0 %v558
      %v783 = vpop.f32.mrf.mxu0
      %v784 = vadd.f32 0.0, %v783
      %v785 = vpop.f32.mrf.mxu0
      %v786 = vadd.f32 0.0, %v785
      %v787 = vpop.f32.mrf.mxu0
      %v788 = vadd.f32 0.0, %v787
      %v789 = vpop.f32.mrf.mxu0
      %v790 = vadd.f32 0.0, %v789
      %791 = vmatprep.mubr.bf16.mxu0 0
      %792 = vmatmul.mubr.bf16.gmra.mxu0 %v559
      %v793 = vpop.f32.mrf.mxu0
      %v794 = vadd.f32 0.0, %v793
      %v795 = vpop.f32.mrf.mxu0
      %v796 = vadd.f32 0.0, %v795
      %v797 = vpop.f32.mrf.mxu0
      %v798 = vadd.f32 0.0, %v797
      %v799 = vpop.f32.mrf.mxu0
      %v800 = vadd.f32 0.0, %v799
      %801 = vmatprep.mubr.bf16.mxu0 0
      %802 = vmatmul.mubr.bf16.gmra.mxu0 %v560
      %v803 = vpop.f32.mrf.mxu0
      %v804 = vadd.f32 0.0, %v803
      %v805 = vpop.f32.mrf.mxu0
      %v806 = vadd.f32 0.0, %v805
      %v807 = vpop.f32.mrf.mxu0
      %v808 = vadd.f32 0.0, %v807
      %v809 = vpop.f32.mrf.mxu0
      %v810 = vadd.f32 0.0, %v809
      %811 = vmatprep.mubr.bf16.mxu0 0
      %812 = vmatmul.mubr.bf16.gmra.mxu0 %v561
      %v813 = vpop.f32.mrf.mxu0
      %v814 = vadd.f32 0.0, %v813
      %v815 = vpop.f32.mrf.mxu0
      %v816 = vadd.f32 0.0, %v815
      %v817 = vpop.f32.mrf.mxu0
      %v818 = vadd.f32 0.0, %v817
      %v819 = vpop.f32.mrf.mxu0
      %v820 = vadd.f32 0.0, %v819
      %821 = vmatprep.mubr.bf16.mxu0 0
      %822 = vmatmul.mubr.bf16.gmra.mxu0 %v562
      %v823 = vpop.f32.mrf.mxu0
      %v824 = vadd.f32 0.0, %v823
      %v825 = vpop.f32.mrf.mxu0
      %v826 = vadd.f32 0.0, %v825
      %v827 = vpop.f32.mrf.mxu0
      %v828 = vadd.f32 0.0, %v827
      %v829 = vpop.f32.mrf.mxu0
      %v830 = vadd.f32 0.0, %v829
      %831 = vmatprep.mubr.bf16.mxu0 0
      %832 = vmatmul.mubr.bf16.gmra.mxu0 %v563
      %v833 = vpop.f32.mrf.mxu0
      %v834 = vadd.f32 0.0, %v833
      %v835 = vpop.f32.mrf.mxu0
      %v836 = vadd.f32 0.0, %v835
      %v837 = vpop.f32.mrf.mxu0
      %v838 = vadd.f32 0.0, %v837
      %v839 = vpop.f32.mrf.mxu0
      %v840 = vadd.f32 0.0, %v839
      %841 = vmatprep.mubr.bf16.mxu0 0
      %842 = vmatmul.mubr.bf16.gmra.mxu0 %v564
      %v843 = vpop.f32.mrf.mxu0
      %v844 = vadd.f32 0.0, %v843
      %v845 = vpop.f32.mrf.mxu0
      %v846 = vadd.f32 0.0, %v845
      %v847 = vpop.f32.mrf.mxu0
      %v848 = vadd.f32 0.0, %v847
      %v849 = vpop.f32.mrf.mxu0
      %v850 = vadd.f32 0.0, %v849
      %851 = vmatprep.mubr.bf16.mxu0 0
      %852 = vmatmul.mubr.bf16.gmra.mxu0 %v565
      %v853 = vpop.f32.mrf.mxu0
      %v854 = vadd.f32 0.0, %v853
      %v855 = vpop.f32.mrf.mxu0
      %v856 = vadd.f32 0.0, %v855
      %v857 = vpop.f32.mrf.mxu0
      %v858 = vadd.f32 0.0, %v857
      %v859 = vpop.f32.mrf.mxu0
      %v860 = vadd.f32 0.0, %v859
      %861 = vmatprep.mubr.bf16.mxu0 0
      %862 = vmatmul.mubr.bf16.gmra.mxu0 %v566
      %v863 = vpop.f32.mrf.mxu0
      %v864 = vadd.f32 0.0, %v863
      %v865 = vpop.f32.mrf.mxu0
      %v866 = vadd.f32 0.0, %v865
      %v867 = vpop.f32.mrf.mxu0
      %v868 = vadd.f32 0.0, %v867
      %v869 = vpop.f32.mrf.mxu0
      %v870 = vadd.f32 0.0, %v869
      %871 = vdwg.mxu0
      %v872 = vld [vmem:[#allocation2] sm:$0xff]
      %v873 = vld [vmem:[#allocation2 + $0x8] sm:$0xff]
      %v874 = vld [vmem:[#allocation2 + $0x10] sm:$0xff]
      %v875 = vld [vmem:[#allocation2 + $0x18] sm:$0xff]
      %v876 = vld [vmem:[#allocation2 + $0x20] sm:$0xff]
      %v877 = vld [vmem:[#allocation2 + $0x28] sm:$0xff]
      %v878 = vld [vmem:[#allocation2 + $0x30] sm:$0xff]
      %v879 = vld [vmem:[#allocation2 + $0x38] sm:$0xff]
      %v880 = vld [vmem:[#allocation2 + $0x40] sm:$0xff]
      %v881 = vld [vmem:[#allocation2 + $0x48] sm:$0xff]
      %v882 = vld [vmem:[#allocation2 + $0x50] sm:$0xff]
      %v883 = vld [vmem:[#allocation2 + $0x58] sm:$0xff]
      %v884 = vld [vmem:[#allocation2 + $0x60] sm:$0xff]
      %v885 = vld [vmem:[#allocation2 + $0x68] sm:$0xff]
      %v886 = vld [vmem:[#allocation2 + $0x70] sm:$0xff]
      %v887 = vld [vmem:[#allocation2 + $0x78] sm:$0xff]
      %v888 = vld [vmem:[#allocation2 + $0x80] sm:$0xff]
      %v889 = vld [vmem:[#allocation2 + $0x88] sm:$0xff]
      %v890 = vld [vmem:[#allocation2 + $0x90] sm:$0xff]
      %v891 = vld [vmem:[#allocation2 + $0x98] sm:$0xff]
      %v892 = vld [vmem:[#allocation2 + $0xa0] sm:$0xff]
      %v893 = vld [vmem:[#allocation2 + $0xa8] sm:$0xff]
      %v894 = vld [vmem:[#allocation2 + $0xb0] sm:$0xff]
      %v895 = vld [vmem:[#allocation2 + $0xb8] sm:$0xff]
      %v896 = vld [vmem:[#allocation2 + $0xc0] sm:$0xff]
      %v897 = vld [vmem:[#allocation2 + $0xc8] sm:$0xff]
      %v898 = vld [vmem:[#allocation2 + $0xd0] sm:$0xff]
      %v899 = vld [vmem:[#allocation2 + $0xd8] sm:$0xff]
      %v900 = vld [vmem:[#allocation2 + $0xe0] sm:$0xff]
      %v901 = vld [vmem:[#allocation2 + $0xe8] sm:$0xff]
      %v902 = vld [vmem:[#allocation2 + $0xf0] sm:$0xff]
      %v903 = vld [vmem:[#allocation2 + $0xf8] sm:$0xff]
      %v904 = vmax.f32 %v714, %v716
      %905 = vmax.xlane.f32.xlu0 %v904
      %v906 = vpop.xlane.xlu0 %905
      %v907 = vmax.f32 %v718, %v720
      %908 = vmax.xlane.f32.xlu0 %v907
      %v909 = vpop.xlane.xlu0 %908
      %v910 = vmax.f32 %v724, %v726
      %911 = vmax.xlane.f32.xlu0 %v910
      %v912 = vpop.xlane.xlu0 %911
      %v913 = vmax.f32 %v728, %v730
      %914 = vmax.xlane.f32.xlu0 %v913
      %v915 = vpop.xlane.xlu0 %914
      %v916 = vmax.f32 %v734, %v736
      %917 = vmax.xlane.f32.xlu0 %v916
      %v918 = vpop.xlane.xlu0 %917
      %v919 = vmax.f32 %v738, %v740
      %920 = vmax.xlane.f32.xlu0 %v919
      %v921 = vpop.xlane.xlu0 %920
      %v922 = vmax.f32 %v744, %v746
      %923 = vmax.xlane.f32.xlu0 %v922
      %v924 = vpop.xlane.xlu0 %923
      %v925 = vmax.f32 %v748, %v750
      %926 = vmax.xlane.f32.xlu0 %v925
      %v927 = vpop.xlane.xlu0 %926
      %v928 = vmax.f32 %v754, %v756
      %929 = vmax.xlane.f32.xlu0 %v928
      %v930 = vpop.xlane.xlu0 %929
      %v931 = vmax.f32 %v758, %v760
      %932 = vmax.xlane.f32.xlu0 %v931
      %v933 = vpop.xlane.xlu0 %932
      %v934 = vmax.f32 %v764, %v766
      %935 = vmax.xlane.f32.xlu0 %v934
      %v936 = vpop.xlane.xlu0 %935
      %v937 = vmax.f32 %v768, %v770
      %938 = vmax.xlane.f32.xlu0 %v937
      %v939 = vpop.xlane.xlu0 %938
      %v940 = vmax.f32 %v774, %v776
      %941 = vmax.xlane.f32.xlu0 %v940
      %v942 = vpop.xlane.xlu0 %941
      %v943 = vmax.f32 %v778, %v780
      %944 = vmax.xlane.f32.xlu0 %v943
      %v945 = vpop.xlane.xlu0 %944
      %v946 = vmax.f32 %v784, %v786
      %947 = vmax.xlane.f32.xlu0 %v946
      %v948 = vpop.xlane.xlu0 %947
      %v949 = vmax.f32 %v788, %v790
      %950 = vmax.xlane.f32.xlu0 %v949
      %v951 = vpop.xlane.xlu0 %950
      %v952 = vmax.f32 %v794, %v796
      %953 = vmax.xlane.f32.xlu0 %v952
      %v954 = vpop.xlane.xlu0 %953
      %v955 = vmax.f32 %v798, %v800
      %956 = vmax.xlane.f32.xlu0 %v955
      %v957 = vpop.xlane.xlu0 %956
      %v958 = vmax.f32 %v804, %v806
      %959 = vmax.xlane.f32.xlu0 %v958
      %v960 = vpop.xlane.xlu0 %959
      %v961 = vmax.f32 %v808, %v810
      %962 = vmax.xlane.f32.xlu0 %v961
      %v963 = vpop.xlane.xlu0 %962
      %v964 = vmax.f32 %v814, %v816
      %965 = vmax.xlane.f32.xlu0 %v964
      %v966 = vpop.xlane.xlu0 %965
      %v967 = vmax.f32 %v818, %v820
      %968 = vmax.xlane.f32.xlu0 %v967
      %v969 = vpop.xlane.xlu0 %968
      %v970 = vmax.f32 %v824, %v826
      %971 = vmax.xlane.f32.xlu0 %v970
      %v972 = vpop.xlane.xlu0 %971
      %v973 = vmax.f32 %v828, %v830
      %974 = vmax.xlane.f32.xlu0 %v973
      %v975 = vpop.xlane.xlu0 %974
      %v976 = vmax.f32 %v834, %v836
      %977 = vmax.xlane.f32.xlu0 %v976
      %v978 = vpop.xlane.xlu0 %977
      %v979 = vmax.f32 %v838, %v840
      %980 = vmax.xlane.f32.xlu0 %v979
      %v981 = vpop.xlane.xlu0 %980
      %v982 = vmax.f32 %v844, %v846
      %983 = vmax.xlane.f32.xlu0 %v982
      %v984 = vpop.xlane.xlu0 %983
      %v985 = vmax.f32 %v848, %v850
      %986 = vmax.xlane.f32.xlu0 %v985
      %v987 = vpop.xlane.xlu0 %986
      %v988 = vmax.f32 %v854, %v856
      %989 = vmax.xlane.f32.xlu0 %v988
      %v990 = vpop.xlane.xlu0 %989
      %v991 = vmax.f32 %v858, %v860
      %992 = vmax.xlane.f32.xlu0 %v991
      %v993 = vpop.xlane.xlu0 %992
      %v994 = vmax.f32 %v864, %v866
      %995 = vmax.xlane.f32.xlu0 %v994
      %v996 = vpop.xlane.xlu0 %995
      %v997 = vmax.f32 %v868, %v870
      %998 = vmax.xlane.f32.xlu0 %v997
      %v999 = vpop.xlane.xlu0 %998
      %v1000 = vmax.f32 %v872, %v906
      %v1001 = vmax.f32 %v873, %v909
      %v1002 = vmax.f32 %v874, %v912
      %v1003 = vmax.f32 %v875, %v915
      %v1004 = vmax.f32 %v876, %v918
      %v1005 = vmax.f32 %v877, %v921
      %v1006 = vmax.f32 %v878, %v924
      %v1007 = vmax.f32 %v879, %v927
      %v1008 = vmax.f32 %v880, %v930
      %v1009 = vmax.f32 %v881, %v933
      %v1010 = vmax.f32 %v882, %v936
      %v1011 = vmax.f32 %v883, %v939
      %v1012 = vmax.f32 %v884, %v942
      %v1013 = vmax.f32 %v885, %v945
      %v1014 = vmax.f32 %v886, %v948
      %v1015 = vmax.f32 %v887, %v951
      %v1016 = vmax.f32 %v888, %v954
      %v1017 = vmax.f32 %v889, %v957
      %v1018 = vmax.f32 %v890, %v960
      %v1019 = vmax.f32 %v891, %v963
      %v1020 = vmax.f32 %v892, %v966
      %v1021 = vmax.f32 %v893, %v969
      %v1022 = vmax.f32 %v894, %v972
      %v1023 = vmax.f32 %v895, %v975
      %v1024 = vmax.f32 %v896, %v978
      %v1025 = vmax.f32 %v897, %v981
      %v1026 = vmax.f32 %v898, %v984
      %v1027 = vmax.f32 %v899, %v987
      %v1028 = vmax.f32 %v900, %v990
      %v1029 = vmax.f32 %v901, %v993
      %v1030 = vmax.f32 %v902, %v996
      %v1031 = vmax.f32 %v903, %v999
      %1033 = vset.pattern.permute.xlu0 0
      %1034 = vperm.xlu0 %1033, %v1000
      %v1035 = vpop.permute.xlu0 %1034
      %1038 = vset.pattern.permute.xlu0 0
      %1039 = vperm.xlu0 %1038, %v1001
      %v1040 = vpop.permute.xlu0 %1039
      %1043 = vset.pattern.permute.xlu0 0
      %1044 = vperm.xlu0 %1043, %v1002
      %v1045 = vpop.permute.xlu0 %1044
      %1048 = vset.pattern.permute.xlu0 0
      %1049 = vperm.xlu0 %1048, %v1003
      %v1050 = vpop.permute.xlu0 %1049
      %1053 = vset.pattern.permute.xlu0 0
      %1054 = vperm.xlu0 %1053, %v1004
      %v1055 = vpop.permute.xlu0 %1054
      %1058 = vset.pattern.permute.xlu0 0
      %1059 = vperm.xlu0 %1058, %v1005
      %v1060 = vpop.permute.xlu0 %1059
      %1063 = vset.pattern.permute.xlu0 0
      %1064 = vperm.xlu0 %1063, %v1006
      %v1065 = vpop.permute.xlu0 %1064
      %1068 = vset.pattern.permute.xlu0 0
      %1069 = vperm.xlu0 %1068, %v1007
      %v1070 = vpop.permute.xlu0 %1069
      %1073 = vset.pattern.permute.xlu0 0
      %1074 = vperm.xlu0 %1073, %v1008
      %v1075 = vpop.permute.xlu0 %1074
      %1078 = vset.pattern.permute.xlu0 0
      %1079 = vperm.xlu0 %1078, %v1009
      %v1080 = vpop.permute.xlu0 %1079
      %1083 = vset.pattern.permute.xlu0 0
      %1084 = vperm.xlu0 %1083, %v1010
      %v1085 = vpop.permute.xlu0 %1084
      %1088 = vset.pattern.permute.xlu0 0
      %1089 = vperm.xlu0 %1088, %v1011
      %v1090 = vpop.permute.xlu0 %1089
      %1093 = vset.pattern.permute.xlu0 0
      %1094 = vperm.xlu0 %1093, %v1012
      %v1095 = vpop.permute.xlu0 %1094
      %1098 = vset.pattern.permute.xlu0 0
      %1099 = vperm.xlu0 %1098, %v1013
      %v1100 = vpop.permute.xlu0 %1099
      %1103 = vset.pattern.permute.xlu0 0
      %1104 = vperm.xlu0 %1103, %v1014
      %v1105 = vpop.permute.xlu0 %1104
      %1108 = vset.pattern.permute.xlu0 0
      %1109 = vperm.xlu0 %1108, %v1015
      %v1110 = vpop.permute.xlu0 %1109
      %1113 = vset.pattern.permute.xlu0 0
      %1114 = vperm.xlu0 %1113, %v1016
      %v1115 = vpop.permute.xlu0 %1114
      %1118 = vset.pattern.permute.xlu0 0
      %1119 = vperm.xlu0 %1118, %v1017
      %v1120 = vpop.permute.xlu0 %1119
      %1123 = vset.pattern.permute.xlu0 0
      %1124 = vperm.xlu0 %1123, %v1018
      %v1125 = vpop.permute.xlu0 %1124
      %1128 = vset.pattern.permute.xlu0 0
      %1129 = vperm.xlu0 %1128, %v1019
      %v1130 = vpop.permute.xlu0 %1129
      %1133 = vset.pattern.permute.xlu0 0
      %1134 = vperm.xlu0 %1133, %v1020
      %v1135 = vpop.permute.xlu0 %1134
      %1138 = vset.pattern.permute.xlu0 0
      %1139 = vperm.xlu0 %1138, %v1021
      %v1140 = vpop.permute.xlu0 %1139
      %1143 = vset.pattern.permute.xlu0 0
      %1144 = vperm.xlu0 %1143, %v1022
      %v1145 = vpop.permute.xlu0 %1144
      %1148 = vset.pattern.permute.xlu0 0
      %1149 = vperm.xlu0 %1148, %v1023
      %v1150 = vpop.permute.xlu0 %1149
      %1153 = vset.pattern.permute.xlu0 0
      %1154 = vperm.xlu0 %1153, %v1024
      %v1155 = vpop.permute.xlu0 %1154
      %1158 = vset.pattern.permute.xlu0 0
      %1159 = vperm.xlu0 %1158, %v1025
      %v1160 = vpop.permute.xlu0 %1159
      %1163 = vset.pattern.permute.xlu0 0
      %1164 = vperm.xlu0 %1163, %v1026
      %v1165 = vpop.permute.xlu0 %1164
      %1168 = vset.pattern.permute.xlu0 0
      %1169 = vperm.xlu0 %1168, %v1027
      %v1170 = vpop.permute.xlu0 %1169
      %1173 = vset.pattern.permute.xlu0 0
      %1174 = vperm.xlu0 %1173, %v1028
      %v1175 = vpop.permute.xlu0 %1174
      %1178 = vset.pattern.permute.xlu0 0
      %1179 = vperm.xlu0 %1178, %v1029
      %v1180 = vpop.permute.xlu0 %1179
      %1183 = vset.pattern.permute.xlu0 0
      %1184 = vperm.xlu0 %1183, %v1030
      %v1185 = vpop.permute.xlu0 %1184
      %1188 = vset.pattern.permute.xlu0 0
      %1189 = vperm.xlu0 %1188, %v1031
      %v1190 = vpop.permute.xlu0 %1189
      %v1192 = vsub.f32 %v714, %v1035
      %v1193 = vsub.f32 %v716, %v1035
      %v1194 = vsub.f32 %v718, %v1040
      %v1195 = vsub.f32 %v720, %v1040
      %v1196 = vsub.f32 %v724, %v1045
      %v1197 = vsub.f32 %v726, %v1045
      %v1198 = vsub.f32 %v728, %v1050
      %v1199 = vsub.f32 %v730, %v1050
      %v1200 = vsub.f32 %v734, %v1055
      %v1201 = vsub.f32 %v736, %v1055
      %v1202 = vsub.f32 %v738, %v1060
      %v1203 = vsub.f32 %v740, %v1060
      %v1204 = vsub.f32 %v744, %v1065
      %v1205 = vsub.f32 %v746, %v1065
      %v1206 = vsub.f32 %v748, %v1070
      %v1207 = vsub.f32 %v750, %v1070
      %v1208 = vsub.f32 %v754, %v1075
      %v1209 = vsub.f32 %v756, %v1075
      %v1210 = vsub.f32 %v758, %v1080
      %v1211 = vsub.f32 %v760, %v1080
      %v1212 = vsub.f32 %v764, %v1085
      %v1213 = vsub.f32 %v766, %v1085
      %v1214 = vsub.f32 %v768, %v1090
      %v1215 = vsub.f32 %v770, %v1090
      %v1216 = vsub.f32 %v774, %v1095
      %v1217 = vsub.f32 %v776, %v1095
      %v1218 = vsub.f32 %v778, %v1100
      %v1219 = vsub.f32 %v780, %v1100
      %v1220 = vsub.f32 %v784, %v1105
      %v1221 = vsub.f32 %v786, %v1105
      %v1222 = vsub.f32 %v788, %v1110
      %v1223 = vsub.f32 %v790, %v1110
      %v1224 = vsub.f32 %v794, %v1115
      %v1225 = vsub.f32 %v796, %v1115
      %v1226 = vsub.f32 %v798, %v1120
      %v1227 = vsub.f32 %v800, %v1120
      %v1228 = vsub.f32 %v804, %v1125
      %v1229 = vsub.f32 %v806, %v1125
      %v1230 = vsub.f32 %v808, %v1130
      %v1231 = vsub.f32 %v810, %v1130
      %v1232 = vsub.f32 %v814, %v1135
      %v1233 = vsub.f32 %v816, %v1135
      %v1234 = vsub.f32 %v818, %v1140
      %v1235 = vsub.f32 %v820, %v1140
      %v1236 = vsub.f32 %v824, %v1145
      %v1237 = vsub.f32 %v826, %v1145
      %v1238 = vsub.f32 %v828, %v1150
      %v1239 = vsub.f32 %v830, %v1150
      %v1240 = vsub.f32 %v834, %v1155
      %v1241 = vsub.f32 %v836, %v1155
      %v1242 = vsub.f32 %v838, %v1160
      %v1243 = vsub.f32 %v840, %v1160
      %v1244 = vsub.f32 %v844, %v1165
      %v1245 = vsub.f32 %v846, %v1165
      %v1246 = vsub.f32 %v848, %v1170
      %v1247 = vsub.f32 %v850, %v1170
      %v1248 = vsub.f32 %v854, %v1175
      %v1249 = vsub.f32 %v856, %v1175
      %v1250 = vsub.f32 %v858, %v1180
      %v1251 = vsub.f32 %v860, %v1180
      %v1252 = vsub.f32 %v864, %v1185
      %v1253 = vsub.f32 %v866, %v1185
      %v1254 = vsub.f32 %v868, %v1190
      %v1255 = vsub.f32 %v870, %v1190
      %v1256 = vmul.f32 %v1192, 1.442695
      %v1257 = vpow.pop %v1256
      %v1258 = vmul.f32 %v1193, 1.442695
      %v1259 = vpow.pop %v1258
      %v1260 = vmul.f32 %v1194, 1.442695
      %v1261 = vpow.pop %v1260
      %v1262 = vmul.f32 %v1195, 1.442695
      %v1263 = vpow.pop %v1262
      %v1264 = vmul.f32 %v1196, 1.442695
      %v1265 = vpow.pop %v1264
      %v1266 = vmul.f32 %v1197, 1.442695
      %v1267 = vpow.pop %v1266
      %v1268 = vmul.f32 %v1198, 1.442695
      %v1269 = vpow.pop %v1268
      %v1270 = vmul.f32 %v1199, 1.442695
      %v1271 = vpow.pop %v1270
      %v1272 = vmul.f32 %v1200, 1.442695
      %v1273 = vpow.pop %v1272
      %v1274 = vmul.f32 %v1201, 1.442695
      %v1275 = vpow.pop %v1274
      %v1276 = vmul.f32 %v1202, 1.442695
      %v1277 = vpow.pop %v1276
      %v1278 = vmul.f32 %v1203, 1.442695
      %v1279 = vpow.pop %v1278
      %v1280 = vmul.f32 %v1204, 1.442695
      %v1281 = vpow.pop %v1280
      %v1282 = vmul.f32 %v1205, 1.442695
      %v1283 = vpow.pop %v1282
      %v1284 = vmul.f32 %v1206, 1.442695
      %v1285 = vpow.pop %v1284
      %v1286 = vmul.f32 %v1207, 1.442695
      %v1287 = vpow.pop %v1286
      %v1288 = vmul.f32 %v1208, 1.442695
      %v1289 = vpow.pop %v1288
      %v1290 = vmul.f32 %v1209, 1.442695
      %v1291 = vpow.pop %v1290
      %v1292 = vmul.f32 %v1210, 1.442695
      %v1293 = vpow.pop %v1292
      %v1294 = vmul.f32 %v1211, 1.442695
      %v1295 = vpow.pop %v1294
      %v1296 = vmul.f32 %v1212, 1.442695
      %v1297 = vpow.pop %v1296
      %v1298 = vmul.f32 %v1213, 1.442695
      %v1299 = vpow.pop %v1298
      %v1300 = vmul.f32 %v1214, 1.442695
      %v1301 = vpow.pop %v1300
      %v1302 = vmul.f32 %v1215, 1.442695
      %v1303 = vpow.pop %v1302
      %v1304 = vmul.f32 %v1216, 1.442695
      %v1305 = vpow.pop %v1304
      %v1306 = vmul.f32 %v1217, 1.442695
      %v1307 = vpow.pop %v1306
      %v1308 = vmul.f32 %v1218, 1.442695
      %v1309 = vpow.pop %v1308
      %v1310 = vmul.f32 %v1219, 1.442695
      %v1311 = vpow.pop %v1310
      %v1312 = vmul.f32 %v1220, 1.442695
      %v1313 = vpow.pop %v1312
      %v1314 = vmul.f32 %v1221, 1.442695
      %v1315 = vpow.pop %v1314
      %v1316 = vmul.f32 %v1222, 1.442695
      %v1317 = vpow.pop %v1316
      %v1318 = vmul.f32 %v1223, 1.442695
      %v1319 = vpow.pop %v1318
      %v1320 = vmul.f32 %v1224, 1.442695
      %v1321 = vpow.pop %v1320
      %v1322 = vmul.f32 %v1225, 1.442695
      %v1323 = vpow.pop %v1322
      %v1324 = vmul.f32 %v1226, 1.442695
      %v1325 = vpow.pop %v1324
      %v1326 = vmul.f32 %v1227, 1.442695
      %v1327 = vpow.pop %v1326
      %v1328 = vmul.f32 %v1228, 1.442695
      %v1329 = vpow.pop %v1328
      %v1330 = vmul.f32 %v1229, 1.442695
      %v1331 = vpow.pop %v1330
      %v1332 = vmul.f32 %v1230, 1.442695
      %v1333 = vpow.pop %v1332
      %v1334 = vmul.f32 %v1231, 1.442695
      %v1335 = vpow.pop %v1334
      %v1336 = vmul.f32 %v1232, 1.442695
      %v1337 = vpow.pop %v1336
      %v1338 = vmul.f32 %v1233, 1.442695
      %v1339 = vpow.pop %v1338
      %v1340 = vmul.f32 %v1234, 1.442695
      %v1341 = vpow.pop %v1340
      %v1342 = vmul.f32 %v1235, 1.442695
      %v1343 = vpow.pop %v1342
      %v1344 = vmul.f32 %v1236, 1.442695
      %v1345 = vpow.pop %v1344
      %v1346 = vmul.f32 %v1237, 1.442695
      %v1347 = vpow.pop %v1346
      %v1348 = vmul.f32 %v1238, 1.442695
      %v1349 = vpow.pop %v1348
      %v1350 = vmul.f32 %v1239, 1.442695
      %v1351 = vpow.pop %v1350
      %v1352 = vmul.f32 %v1240, 1.442695
      %v1353 = vpow.pop %v1352
      %v1354 = vmul.f32 %v1241, 1.442695
      %v1355 = vpow.pop %v1354
      %v1356 = vmul.f32 %v1242, 1.442695
      %v1357 = vpow.pop %v1356
      %v1358 = vmul.f32 %v1243, 1.442695
      %v1359 = vpow.pop %v1358
      %v1360 = vmul.f32 %v1244, 1.442695
      %v1361 = vpow.pop %v1360
      %v1362 = vmul.f32 %v1245, 1.442695
      %v1363 = vpow.pop %v1362
      %v1364 = vmul.f32 %v1246, 1.442695
      %v1365 = vpow.pop %v1364
      %v1366 = vmul.f32 %v1247, 1.442695
      %v1367 = vpow.pop %v1366
      %v1368 = vmul.f32 %v1248, 1.442695
      %v1369 = vpow.pop %v1368
      %v1370 = vmul.f32 %v1249, 1.442695
      %v1371 = vpow.pop %v1370
      %v1372 = vmul.f32 %v1250, 1.442695
      %v1373 = vpow.pop %v1372
      %v1374 = vmul.f32 %v1251, 1.442695
      %v1375 = vpow.pop %v1374
      %v1376 = vmul.f32 %v1252, 1.442695
      %v1377 = vpow.pop %v1376
      %v1378 = vmul.f32 %v1253, 1.442695
      %v1379 = vpow.pop %v1378
      %v1380 = vmul.f32 %v1254, 1.442695
      %v1381 = vpow.pop %v1380
      %v1382 = vmul.f32 %v1255, 1.442695
      %v1383 = vpow.pop %v1382
      %v1384 = vsub.f32 %v872, %v1000
      %v1385 = vsub.f32 %v873, %v1001
      %v1386 = vsub.f32 %v874, %v1002
      %v1387 = vsub.f32 %v875, %v1003
      %v1388 = vsub.f32 %v876, %v1004
      %v1389 = vsub.f32 %v877, %v1005
      %v1390 = vsub.f32 %v878, %v1006
      %v1391 = vsub.f32 %v879, %v1007
      %v1392 = vsub.f32 %v880, %v1008
      %v1393 = vsub.f32 %v881, %v1009
      %v1394 = vsub.f32 %v882, %v1010
      %v1395 = vsub.f32 %v883, %v1011
      %v1396 = vsub.f32 %v884, %v1012
      %v1397 = vsub.f32 %v885, %v1013
      %v1398 = vsub.f32 %v886, %v1014
      %v1399 = vsub.f32 %v887, %v1015
      %v1400 = vsub.f32 %v888, %v1016
      %v1401 = vsub.f32 %v889, %v1017
      %v1402 = vsub.f32 %v890, %v1018
      %v1403 = vsub.f32 %v891, %v1019
      %v1404 = vsub.f32 %v892, %v1020
      %v1405 = vsub.f32 %v893, %v1021
      %v1406 = vsub.f32 %v894, %v1022
      %v1407 = vsub.f32 %v895, %v1023
      %v1408 = vsub.f32 %v896, %v1024
      %v1409 = vsub.f32 %v897, %v1025
      %v1410 = vsub.f32 %v898, %v1026
      %v1411 = vsub.f32 %v899, %v1027
      %v1412 = vsub.f32 %v900, %v1028
      %v1413 = vsub.f32 %v901, %v1029
      %v1414 = vsub.f32 %v902, %v1030
      %v1415 = vsub.f32 %v903, %v1031
      %v1416 = vmul.f32 %v1384, 1.442695
      %v1417 = vpow.pop %v1416
      %v1418 = vmul.f32 %v1385, 1.442695
      %v1419 = vpow.pop %v1418
      %v1420 = vmul.f32 %v1386, 1.442695
      %v1421 = vpow.pop %v1420
      %v1422 = vmul.f32 %v1387, 1.442695
      %v1423 = vpow.pop %v1422
      %v1424 = vmul.f32 %v1388, 1.442695
      %v1425 = vpow.pop %v1424
      %v1426 = vmul.f32 %v1389, 1.442695
      %v1427 = vpow.pop %v1426
      %v1428 = vmul.f32 %v1390, 1.442695
      %v1429 = vpow.pop %v1428
      %v1430 = vmul.f32 %v1391, 1.442695
      %v1431 = vpow.pop %v1430
      %v1432 = vmul.f32 %v1392, 1.442695
      %v1433 = vpow.pop %v1432
      %v1434 = vmul.f32 %v1393, 1.442695
      %v1435 = vpow.pop %v1434
      %v1436 = vmul.f32 %v1394, 1.442695
      %v1437 = vpow.pop %v1436
      %v1438 = vmul.f32 %v1395, 1.442695
      %v1439 = vpow.pop %v1438
      %v1440 = vmul.f32 %v1396, 1.442695
      %v1441 = vpow.pop %v1440
      %v1442 = vmul.f32 %v1397, 1.442695
      %v1443 = vpow.pop %v1442
      %v1444 = vmul.f32 %v1398, 1.442695
      %v1445 = vpow.pop %v1444
      %v1446 = vmul.f32 %v1399, 1.442695
      %v1447 = vpow.pop %v1446
      %v1448 = vmul.f32 %v1400, 1.442695
      %v1449 = vpow.pop %v1448
      %v1450 = vmul.f32 %v1401, 1.442695
      %v1451 = vpow.pop %v1450
      %v1452 = vmul.f32 %v1402, 1.442695
      %v1453 = vpow.pop %v1452
      %v1454 = vmul.f32 %v1403, 1.442695
      %v1455 = vpow.pop %v1454
      %v1456 = vmul.f32 %v1404, 1.442695
      %v1457 = vpow.pop %v1456
      %v1458 = vmul.f32 %v1405, 1.442695
      %v1459 = vpow.pop %v1458
      %v1460 = vmul.f32 %v1406, 1.442695
      %v1461 = vpow.pop %v1460
      %v1462 = vmul.f32 %v1407, 1.442695
      %v1463 = vpow.pop %v1462
      %v1464 = vmul.f32 %v1408, 1.442695
      %v1465 = vpow.pop %v1464
      %v1466 = vmul.f32 %v1409, 1.442695
      %v1467 = vpow.pop %v1466
      %v1468 = vmul.f32 %v1410, 1.442695
      %v1469 = vpow.pop %v1468
      %v1470 = vmul.f32 %v1411, 1.442695
      %v1471 = vpow.pop %v1470
      %v1472 = vmul.f32 %v1412, 1.442695
      %v1473 = vpow.pop %v1472
      %v1474 = vmul.f32 %v1413, 1.442695
      %v1475 = vpow.pop %v1474
      %v1476 = vmul.f32 %v1414, 1.442695
      %v1477 = vpow.pop %v1476
      %v1478 = vmul.f32 %v1415, 1.442695
      %v1479 = vpow.pop %v1478
      %v1480 = vld [vmem:[#allocation3] sm:$0xff]
      %v1481 = vld [vmem:[#allocation3 + $0x8] sm:$0xff]
      %v1482 = vld [vmem:[#allocation3 + $0x10] sm:$0xff]
      %v1483 = vld [vmem:[#allocation3 + $0x18] sm:$0xff]
      %v1484 = vld [vmem:[#allocation3 + $0x20] sm:$0xff]
      %v1485 = vld [vmem:[#allocation3 + $0x28] sm:$0xff]
      %v1486 = vld [vmem:[#allocation3 + $0x30] sm:$0xff]
      %v1487 = vld [vmem:[#allocation3 + $0x38] sm:$0xff]
      %v1488 = vld [vmem:[#allocation3 + $0x40] sm:$0xff]
      %v1489 = vld [vmem:[#allocation3 + $0x48] sm:$0xff]
      %v1490 = vld [vmem:[#allocation3 + $0x50] sm:$0xff]
      %v1491 = vld [vmem:[#allocation3 + $0x58] sm:$0xff]
      %v1492 = vld [vmem:[#allocation3 + $0x60] sm:$0xff]
      %v1493 = vld [vmem:[#allocation3 + $0x68] sm:$0xff]
      %v1494 = vld [vmem:[#allocation3 + $0x70] sm:$0xff]
      %v1495 = vld [vmem:[#allocation3 + $0x78] sm:$0xff]
      %v1496 = vld [vmem:[#allocation3 + $0x80] sm:$0xff]
      %v1497 = vld [vmem:[#allocation3 + $0x88] sm:$0xff]
      %v1498 = vld [vmem:[#allocation3 + $0x90] sm:$0xff]
      %v1499 = vld [vmem:[#allocation3 + $0x98] sm:$0xff]
      %v1500 = vld [vmem:[#allocation3 + $0xa0] sm:$0xff]
      %v1501 = vld [vmem:[#allocation3 + $0xa8] sm:$0xff]
      %v1502 = vld [vmem:[#allocation3 + $0xb0] sm:$0xff]
      %v1503 = vld [vmem:[#allocation3 + $0xb8] sm:$0xff]
      %v1504 = vld [vmem:[#allocation3 + $0xc0] sm:$0xff]
      %v1505 = vld [vmem:[#allocation3 + $0xc8] sm:$0xff]
      %v1506 = vld [vmem:[#allocation3 + $0xd0] sm:$0xff]
      %v1507 = vld [vmem:[#allocation3 + $0xd8] sm:$0xff]
      %v1508 = vld [vmem:[#allocation3 + $0xe0] sm:$0xff]
      %v1509 = vld [vmem:[#allocation3 + $0xe8] sm:$0xff]
      %v1510 = vld [vmem:[#allocation3 + $0xf0] sm:$0xff]
      %v1511 = vld [vmem:[#allocation3 + $0xf8] sm:$0xff]
      %v1512 = vmul.f32 %v1417, %v1480
      %v1513 = vmul.f32 %v1419, %v1481
      %v1514 = vmul.f32 %v1421, %v1482
      %v1515 = vmul.f32 %v1423, %v1483
      %v1516 = vmul.f32 %v1425, %v1484
      %v1517 = vmul.f32 %v1427, %v1485
      %v1518 = vmul.f32 %v1429, %v1486
      %v1519 = vmul.f32 %v1431, %v1487
      %v1520 = vmul.f32 %v1433, %v1488
      %v1521 = vmul.f32 %v1435, %v1489
      %v1522 = vmul.f32 %v1437, %v1490
      %v1523 = vmul.f32 %v1439, %v1491
      %v1524 = vmul.f32 %v1441, %v1492
      %v1525 = vmul.f32 %v1443, %v1493
      %v1526 = vmul.f32 %v1445, %v1494
      %v1527 = vmul.f32 %v1447, %v1495
      %v1528 = vmul.f32 %v1449, %v1496
      %v1529 = vmul.f32 %v1451, %v1497
      %v1530 = vmul.f32 %v1453, %v1498
      %v1531 = vmul.f32 %v1455, %v1499
      %v1532 = vmul.f32 %v1457, %v1500
      %v1533 = vmul.f32 %v1459, %v1501
      %v1534 = vmul.f32 %v1461, %v1502
      %v1535 = vmul.f32 %v1463, %v1503
      %v1536 = vmul.f32 %v1465, %v1504
      %v1537 = vmul.f32 %v1467, %v1505
      %v1538 = vmul.f32 %v1469, %v1506
      %v1539 = vmul.f32 %v1471, %v1507
      %v1540 = vmul.f32 %v1473, %v1508
      %v1541 = vmul.f32 %v1475, %v1509
      %v1542 = vmul.f32 %v1477, %v1510
      %v1543 = vmul.f32 %v1479, %v1511
      %v1544 = vadd.f32 %v1257, %v1259
      %1545 = vadd.xlane.f32.xlu0 %v1544
      %v1546 = vpop.xlane.xlu0 %1545
      %v1547 = vadd.f32 %v1261, %v1263
      %1548 = vadd.xlane.f32.xlu0 %v1547
      %v1549 = vpop.xlane.xlu0 %1548
      %v1550 = vadd.f32 %v1265, %v1267
      %1551 = vadd.xlane.f32.xlu0 %v1550
      %v1552 = vpop.xlane.xlu0 %1551
      %v1553 = vadd.f32 %v1269, %v1271
      %1554 = vadd.xlane.f32.xlu0 %v1553
      %v1555 = vpop.xlane.xlu0 %1554
      %v1556 = vadd.f32 %v1273, %v1275
      %1557 = vadd.xlane.f32.xlu0 %v1556
      %v1558 = vpop.xlane.xlu0 %1557
      %v1559 = vadd.f32 %v1277, %v1279
      %1560 = vadd.xlane.f32.xlu0 %v1559
      %v1561 = vpop.xlane.xlu0 %1560
      %v1562 = vadd.f32 %v1281, %v1283
      %1563 = vadd.xlane.f32.xlu0 %v1562
      %v1564 = vpop.xlane.xlu0 %1563
      %v1565 = vadd.f32 %v1285, %v1287
      %1566 = vadd.xlane.f32.xlu0 %v1565
      %v1567 = vpop.xlane.xlu0 %1566
      %v1568 = vadd.f32 %v1289, %v1291
      %1569 = vadd.xlane.f32.xlu0 %v1568
      %v1570 = vpop.xlane.xlu0 %1569
      %v1571 = vadd.f32 %v1293, %v1295
      %1572 = vadd.xlane.f32.xlu0 %v1571
      %v1573 = vpop.xlane.xlu0 %1572
      %v1574 = vadd.f32 %v1297, %v1299
      %1575 = vadd.xlane.f32.xlu0 %v1574
      %v1576 = vpop.xlane.xlu0 %1575
      %v1577 = vadd.f32 %v1301, %v1303
      %1578 = vadd.xlane.f32.xlu0 %v1577
      %v1579 = vpop.xlane.xlu0 %1578
      %v1580 = vadd.f32 %v1305, %v1307
      %1581 = vadd.xlane.f32.xlu0 %v1580
      %v1582 = vpop.xlane.xlu0 %1581
      %v1583 = vadd.f32 %v1309, %v1311
      %1584 = vadd.xlane.f32.xlu0 %v1583
      %v1585 = vpop.xlane.xlu0 %1584
      %v1586 = vadd.f32 %v1313, %v1315
      %1587 = vadd.xlane.f32.xlu0 %v1586
      %v1588 = vpop.xlane.xlu0 %1587
      %v1589 = vadd.f32 %v1317, %v1319
      %1590 = vadd.xlane.f32.xlu0 %v1589
      %v1591 = vpop.xlane.xlu0 %1590
      %v1592 = vadd.f32 %v1321, %v1323
      %1593 = vadd.xlane.f32.xlu0 %v1592
      %v1594 = vpop.xlane.xlu0 %1593
      %v1595 = vadd.f32 %v1325, %v1327
      %1596 = vadd.xlane.f32.xlu0 %v1595
      %v1597 = vpop.xlane.xlu0 %1596
      %v1598 = vadd.f32 %v1329, %v1331
      %1599 = vadd.xlane.f32.xlu0 %v1598
      %v1600 = vpop.xlane.xlu0 %1599
      %v1601 = vadd.f32 %v1333, %v1335
      %1602 = vadd.xlane.f32.xlu0 %v1601
      %v1603 = vpop.xlane.xlu0 %1602
      %v1604 = vadd.f32 %v1337, %v1339
      %1605 = vadd.xlane.f32.xlu0 %v1604
      %v1606 = vpop.xlane.xlu0 %1605
      %v1607 = vadd.f32 %v1341, %v1343
      %1608 = vadd.xlane.f32.xlu0 %v1607
      %v1609 = vpop.xlane.xlu0 %1608
      %v1610 = vadd.f32 %v1345, %v1347
      %1611 = vadd.xlane.f32.xlu0 %v1610
      %v1612 = vpop.xlane.xlu0 %1611
      %v1613 = vadd.f32 %v1349, %v1351
      %1614 = vadd.xlane.f32.xlu0 %v1613
      %v1615 = vpop.xlane.xlu0 %1614
      %v1616 = vadd.f32 %v1353, %v1355
      %1617 = vadd.xlane.f32.xlu0 %v1616
      %v1618 = vpop.xlane.xlu0 %1617
      %v1619 = vadd.f32 %v1357, %v1359
      %1620 = vadd.xlane.f32.xlu0 %v1619
      %v1621 = vpop.xlane.xlu0 %1620
      %v1622 = vadd.f32 %v1361, %v1363
      %1623 = vadd.xlane.f32.xlu0 %v1622
      %v1624 = vpop.xlane.xlu0 %1623
      %v1625 = vadd.f32 %v1365, %v1367
      %1626 = vadd.xlane.f32.xlu0 %v1625
      %v1627 = vpop.xlane.xlu0 %1626
      %v1628 = vadd.f32 %v1369, %v1371
      %1629 = vadd.xlane.f32.xlu0 %v1628
      %v1630 = vpop.xlane.xlu0 %1629
      %v1631 = vadd.f32 %v1373, %v1375
      %1632 = vadd.xlane.f32.xlu0 %v1631
      %v1633 = vpop.xlane.xlu0 %1632
      %v1634 = vadd.f32 %v1377, %v1379
      %1635 = vadd.xlane.f32.xlu0 %v1634
      %v1636 = vpop.xlane.xlu0 %1635
      %v1637 = vadd.f32 %v1381, %v1383
      %1638 = vadd.xlane.f32.xlu0 %v1637
      %v1639 = vpop.xlane.xlu0 %1638
      %v1640 = vadd.f32 %v1512, %v1546
      %v1641 = vadd.f32 %v1513, %v1549
      %v1642 = vadd.f32 %v1514, %v1552
      %v1643 = vadd.f32 %v1515, %v1555
      %v1644 = vadd.f32 %v1516, %v1558
      %v1645 = vadd.f32 %v1517, %v1561
      %v1646 = vadd.f32 %v1518, %v1564
      %v1647 = vadd.f32 %v1519, %v1567
      %v1648 = vadd.f32 %v1520, %v1570
      %v1649 = vadd.f32 %v1521, %v1573
      %v1650 = vadd.f32 %v1522, %v1576
      %v1651 = vadd.f32 %v1523, %v1579
      %v1652 = vadd.f32 %v1524, %v1582
      %v1653 = vadd.f32 %v1525, %v1585
      %v1654 = vadd.f32 %v1526, %v1588
      %v1655 = vadd.f32 %v1527, %v1591
      %v1656 = vadd.f32 %v1528, %v1594
      %v1657 = vadd.f32 %v1529, %v1597
      %v1658 = vadd.f32 %v1530, %v1600
      %v1659 = vadd.f32 %v1531, %v1603
      %v1660 = vadd.f32 %v1532, %v1606
      %v1661 = vadd.f32 %v1533, %v1609
      %v1662 = vadd.f32 %v1534, %v1612
      %v1663 = vadd.f32 %v1535, %v1615
      %v1664 = vadd.f32 %v1536, %v1618
      %v1665 = vadd.f32 %v1537, %v1621
      %v1666 = vadd.f32 %v1538, %v1624
      %v1667 = vadd.f32 %v1539, %v1627
      %v1668 = vadd.f32 %v1540, %v1630
      %v1669 = vadd.f32 %v1541, %v1633
      %v1670 = vadd.f32 %v1542, %v1636
      %v1671 = vadd.f32 %v1543, %v1639
      %vm1672 = vcmask 7168
      %1673 = vst.msk [vmem:[#allocation3] sm:$0xff] %vm1672, %v1640
      %1674 = vst.msk [vmem:[#allocation3 + $0x8] sm:$0xff] %vm1672, %v1641
      %1675 = vst.msk [vmem:[#allocation3 + $0x10] sm:$0xff] %vm1672, %v1642
      %1676 = vst.msk [vmem:[#allocation3 + $0x18] sm:$0xff] %vm1672, %v1643
      %1677 = vst.msk [vmem:[#allocation3 + $0x20] sm:$0xff] %vm1672, %v1644
      %1678 = vst.msk [vmem:[#allocation3 + $0x28] sm:$0xff] %vm1672, %v1645
      %1679 = vst.msk [vmem:[#allocation3 + $0x30] sm:$0xff] %vm1672, %v1646
      %1680 = vst.msk [vmem:[#allocation3 + $0x38] sm:$0xff] %vm1672, %v1647
      %1681 = vst.msk [vmem:[#allocation3 + $0x40] sm:$0xff] %vm1672, %v1648
      %1682 = vst.msk [vmem:[#allocation3 + $0x48] sm:$0xff] %vm1672, %v1649
      %1683 = vst.msk [vmem:[#allocation3 + $0x50] sm:$0xff] %vm1672, %v1650
      %1684 = vst.msk [vmem:[#allocation3 + $0x58] sm:$0xff] %vm1672, %v1651
      %1685 = vst.msk [vmem:[#allocation3 + $0x60] sm:$0xff] %vm1672, %v1652
      %1686 = vst.msk [vmem:[#allocation3 + $0x68] sm:$0xff] %vm1672, %v1653
      %1687 = vst.msk [vmem:[#allocation3 + $0x70] sm:$0xff] %vm1672, %v1654
      %1688 = vst.msk [vmem:[#allocation3 + $0x78] sm:$0xff] %vm1672, %v1655
      %1689 = vst.msk [vmem:[#allocation3 + $0x80] sm:$0xff] %vm1672, %v1656
      %1690 = vst.msk [vmem:[#allocation3 + $0x88] sm:$0xff] %vm1672, %v1657
      %1691 = vst.msk [vmem:[#allocation3 + $0x90] sm:$0xff] %vm1672, %v1658
      %1692 = vst.msk [vmem:[#allocation3 + $0x98] sm:$0xff] %vm1672, %v1659
      %1693 = vst.msk [vmem:[#allocation3 + $0xa0] sm:$0xff] %vm1672, %v1660
      %1694 = vst.msk [vmem:[#allocation3 + $0xa8] sm:$0xff] %vm1672, %v1661
      %1695 = vst.msk [vmem:[#allocation3 + $0xb0] sm:$0xff] %vm1672, %v1662
      %1696 = vst.msk [vmem:[#allocation3 + $0xb8] sm:$0xff] %vm1672, %v1663
      %1697 = vst.msk [vmem:[#allocation3 + $0xc0] sm:$0xff] %vm1672, %v1664
      %1698 = vst.msk [vmem:[#allocation3 + $0xc8] sm:$0xff] %vm1672, %v1665
      %1699 = vst.msk [vmem:[#allocation3 + $0xd0] sm:$0xff] %vm1672, %v1666
      %1700 = vst.msk [vmem:[#allocation3 + $0xd8] sm:$0xff] %vm1672, %v1667
      %1701 = vst.msk [vmem:[#allocation3 + $0xe0] sm:$0xff] %vm1672, %v1668
      %1702 = vst.msk [vmem:[#allocation3 + $0xe8] sm:$0xff] %vm1672, %v1669
      %1703 = vst.msk [vmem:[#allocation3 + $0xf0] sm:$0xff] %vm1672, %v1670
      %1704 = vst.msk [vmem:[#allocation3 + $0xf8] sm:$0xff] %vm1672, %v1671
      %v1705 = vld [vmem:[#allocation4] sm:$0xff]
      %v1706 = vld [vmem:[#allocation4 + $0x8] sm:$0xff]
      %v1707 = vld [vmem:[#allocation4 + $0x10] sm:$0xff]
      %v1708 = vld [vmem:[#allocation4 + $0x18] sm:$0xff]
      %v1709 = vld [vmem:[#allocation4 + $0x20] sm:$0xff]
      %v1710 = vld [vmem:[#allocation4 + $0x28] sm:$0xff]
      %v1711 = vld [vmem:[#allocation4 + $0x30] sm:$0xff]
      %v1712 = vld [vmem:[#allocation4 + $0x38] sm:$0xff]
      %v1713 = vld [vmem:[#allocation4 + $0x40] sm:$0xff]
      %v1714 = vld [vmem:[#allocation4 + $0x48] sm:$0xff]
      %v1715 = vld [vmem:[#allocation4 + $0x50] sm:$0xff]
      %v1716 = vld [vmem:[#allocation4 + $0x58] sm:$0xff]
      %v1717 = vld [vmem:[#allocation4 + $0x60] sm:$0xff]
      %v1718 = vld [vmem:[#allocation4 + $0x68] sm:$0xff]
      %v1719 = vld [vmem:[#allocation4 + $0x70] sm:$0xff]
      %v1720 = vld [vmem:[#allocation4 + $0x78] sm:$0xff]
      %v1721 = vld [vmem:[#allocation4 + $0x80] sm:$0xff]
      %v1722 = vld [vmem:[#allocation4 + $0x88] sm:$0xff]
      %v1723 = vld [vmem:[#allocation4 + $0x90] sm:$0xff]
      %v1724 = vld [vmem:[#allocation4 + $0x98] sm:$0xff]
      %v1725 = vld [vmem:[#allocation4 + $0xa0] sm:$0xff]
      %v1726 = vld [vmem:[#allocation4 + $0xa8] sm:$0xff]
      %v1727 = vld [vmem:[#allocation4 + $0xb0] sm:$0xff]
      %v1728 = vld [vmem:[#allocation4 + $0xb8] sm:$0xff]
      %v1729 = vld [vmem:[#allocation4 + $0xc0] sm:$0xff]
      %v1730 = vld [vmem:[#allocation4 + $0xc8] sm:$0xff]
      %v1731 = vld [vmem:[#allocation4 + $0xd0] sm:$0xff]
      %v1732 = vld [vmem:[#allocation4 + $0xd8] sm:$0xff]
      %v1733 = vld [vmem:[#allocation4 + $0xe0] sm:$0xff]
      %v1734 = vld [vmem:[#allocation4 + $0xe8] sm:$0xff]
      %v1735 = vld [vmem:[#allocation4 + $0xf0] sm:$0xff]
      %v1736 = vld [vmem:[#allocation4 + $0xf8] sm:$0xff]
      %v1737 = vpack.c.bf16 %v1261, %v1257
      %v1738 = vpack.c.bf16 %v1263, %v1259
      %v1739 = vpack.c.bf16 %v1269, %v1265
      %v1740 = vpack.c.bf16 %v1271, %v1267
      %v1741 = vpack.c.bf16 %v1277, %v1273
      %v1742 = vpack.c.bf16 %v1279, %v1275
      %v1743 = vpack.c.bf16 %v1285, %v1281
      %v1744 = vpack.c.bf16 %v1287, %v1283
      %v1745 = vpack.c.bf16 %v1293, %v1289
      %v1746 = vpack.c.bf16 %v1295, %v1291
      %v1747 = vpack.c.bf16 %v1301, %v1297
      %v1748 = vpack.c.bf16 %v1303, %v1299
      %v1749 = vpack.c.bf16 %v1309, %v1305
      %v1750 = vpack.c.bf16 %v1311, %v1307
      %v1751 = vpack.c.bf16 %v1317, %v1313
      %v1752 = vpack.c.bf16 %v1319, %v1315
      %v1753 = vpack.c.bf16 %v1325, %v1321
      %v1754 = vpack.c.bf16 %v1327, %v1323
      %v1755 = vpack.c.bf16 %v1333, %v1329
      %v1756 = vpack.c.bf16 %v1335, %v1331
      %v1757 = vpack.c.bf16 %v1341, %v1337
      %v1758 = vpack.c.bf16 %v1343, %v1339
      %v1759 = vpack.c.bf16 %v1349, %v1345
      %v1760 = vpack.c.bf16 %v1351, %v1347
      %v1761 = vpack.c.bf16 %v1357, %v1353
      %v1762 = vpack.c.bf16 %v1359, %v1355
      %v1763 = vpack.c.bf16 %v1365, %v1361
      %v1764 = vpack.c.bf16 %v1367, %v1363
      %v1765 = vpack.c.bf16 %v1373, %v1369
      %v1766 = vpack.c.bf16 %v1375, %v1371
      %v1767 = vpack.c.bf16 %v1381, %v1377
      %v1768 = vpack.c.bf16 %v1383, %v1379
      %v1801 = vunpack.c.l.b16 %v455
      %v1802 = vunpack.c.l.b16 %v456
      %v1803 = vunpack.c.l.b16 %v457
      %v1804 = vunpack.c.l.b16 %v458
      %v1805 = vunpack.c.l.b16 %v459
      %v1806 = vunpack.c.l.b16 %v460
      %v1807 = vunpack.c.l.b16 %v461
      %v1808 = vunpack.c.l.b16 %v462
      %v1809 = vunpack.c.l.b16 %v463
      %v1810 = vunpack.c.l.b16 %v464
      %v1811 = vunpack.c.l.b16 %v465
      %v1812 = vunpack.c.l.b16 %v466
      %v1813 = vunpack.c.l.b16 %v467
      %v1814 = vunpack.c.l.b16 %v468
      %v1815 = vunpack.c.l.b16 %v469
      %v1816 = vunpack.c.l.b16 %v470
      %v1817 = vunpack.c.l.b16 %v471
      %v1818 = vunpack.c.l.b16 %v472
      %v1819 = vunpack.c.l.b16 %v473
      %v1820 = vunpack.c.l.b16 %v474
      %v1821 = vunpack.c.l.b16 %v475
      %v1822 = vunpack.c.l.b16 %v476
      %v1823 = vunpack.c.l.b16 %v477
      %v1824 = vunpack.c.l.b16 %v478
      %v1825 = vunpack.c.l.b16 %v479
      %v1826 = vunpack.c.l.b16 %v480
      %v1827 = vunpack.c.l.b16 %v481
      %v1828 = vunpack.c.l.b16 %v482
      %v1829 = vunpack.c.l.b16 %v483
      %v1830 = vunpack.c.l.b16 %v484
      %v1831 = vunpack.c.l.b16 %v485
      %v1832 = vunpack.c.l.b16 %v486
      %v1833 = vpack.c.b16 %v1802, %v1801
      %v1834 = vpack.c.b16 %v1804, %v1803
      %v1835 = vpack.c.b16 %v1806, %v1805
      %v1836 = vpack.c.b16 %v1808, %v1807
      %v1837 = vpack.c.b16 %v1810, %v1809
      %v1838 = vpack.c.b16 %v1812, %v1811
      %v1839 = vpack.c.b16 %v1814, %v1813
      %v1840 = vpack.c.b16 %v1816, %v1815
      %v1841 = vpack.c.b16 %v1818, %v1817
      %v1842 = vpack.c.b16 %v1820, %v1819
      %v1843 = vpack.c.b16 %v1822, %v1821
      %v1844 = vpack.c.b16 %v1824, %v1823
      %v1845 = vpack.c.b16 %v1826, %v1825
      %v1846 = vpack.c.b16 %v1828, %v1827
      %v1847 = vpack.c.b16 %v1830, %v1829
      %v1848 = vpack.c.b16 %v1832, %v1831
      %1865 = vmatprep.subr.bf16.mxu0 0
      %1866 = vmatpush1.bf16.msra.mxu0 %v1840
      %1867 = vmatprep.subr.bf16.mxu0 0
      %1868 = vmatpush1.bf16.msra.mxu0 %v1839
      %1869 = vmatprep.subr.bf16.mxu0 0
      %1870 = vmatpush1.bf16.msra.mxu0 %v1838
      %1871 = vmatprep.subr.bf16.mxu0 0
      %1872 = vmatpush1.bf16.msra.mxu0 %v1837
      %1873 = vmatprep.subr.bf16.mxu0 0
      %1874 = vmatpush1.bf16.msra.mxu0 %v1836
      %1875 = vmatprep.subr.bf16.mxu0 0
      %1876 = vmatpush1.bf16.msra.mxu0 %v1835
      %1877 = vmatprep.subr.bf16.mxu0 0
      %1878 = vmatpush1.bf16.msra.mxu0 %v1834
      %1879 = vmatprep.subr.bf16.mxu0 0
      %1880 = vmatpush1.bf16.msra.mxu0 %v1833
      %1881 = vmatprep.subr.bf16.mxu0 0
      %1882 = vmatpush2.bf16.msra.mxu0 %v1848
      %1883 = vmatprep.subr.bf16.mxu0 0
      %1884 = vmatpush2.bf16.msra.mxu0 %v1847
      %1885 = vmatprep.subr.bf16.mxu0 0
      %1886 = vmatpush2.bf16.msra.mxu0 %v1846
      %1887 = vmatprep.subr.bf16.mxu0 0
      %1888 = vmatpush2.bf16.msra.mxu0 %v1845
      %1889 = vmatprep.subr.bf16.mxu0 0
      %1890 = vmatpush2.bf16.msra.mxu0 %v1844
      %1891 = vmatprep.subr.bf16.mxu0 0
      %1892 = vmatpush2.bf16.msra.mxu0 %v1843
      %1893 = vmatprep.subr.bf16.mxu0 0
      %1894 = vmatpush2.bf16.msra.mxu0 %v1842
      %1895 = vmatprep.subr.bf16.mxu0 0
      %1896 = vmatpush2.bf16.msra.mxu0 %v1841
      %1897 = vmatprep.mubr.bf16.mxu0 %v1738
      %1898 = vmatmul.mubr.bf16.gmra.mxu0 %v1737
      %v1899 = vpop.f32.mrf.mxu0
      %v1900 = vadd.f32 0.0, %v1899
      %v1901 = vpop.f32.mrf.mxu0
      %v1902 = vpop.f32.mrf.mxu0
      %v1903 = vadd.f32 0.0, %v1902
      %v1904 = vpop.f32.mrf.mxu0
      %1905 = vmatprep.mubr.bf16.mxu0 %v1740
      %1906 = vmatmul.mubr.bf16.gmra.mxu0 %v1739
      %v1907 = vpop.f32.mrf.mxu0
      %v1908 = vadd.f32 0.0, %v1907
      %v1909 = vpop.f32.mrf.mxu0
      %v1910 = vpop.f32.mrf.mxu0
      %v1911 = vadd.f32 0.0, %v1910
      %v1912 = vpop.f32.mrf.mxu0
      %1913 = vmatprep.mubr.bf16.mxu0 %v1742
      %1914 = vmatmul.mubr.bf16.gmra.mxu0 %v1741
      %v1915 = vpop.f32.mrf.mxu0
      %v1916 = vadd.f32 0.0, %v1915
      %v1917 = vpop.f32.mrf.mxu0
      %v1918 = vpop.f32.mrf.mxu0
      %v1919 = vadd.f32 0.0, %v1918
      %v1920 = vpop.f32.mrf.mxu0
      %1921 = vmatprep.mubr.bf16.mxu0 %v1744
      %1922 = vmatmul.mubr.bf16.gmra.mxu0 %v1743
      %v1923 = vpop.f32.mrf.mxu0
      %v1924 = vadd.f32 0.0, %v1923
      %v1925 = vpop.f32.mrf.mxu0
      %v1926 = vpop.f32.mrf.mxu0
      %v1927 = vadd.f32 0.0, %v1926
      %v1928 = vpop.f32.mrf.mxu0
      %1929 = vmatprep.mubr.bf16.mxu0 %v1746
      %1930 = vmatmul.mubr.bf16.gmra.mxu0 %v1745
      %v1931 = vpop.f32.mrf.mxu0
      %v1932 = vadd.f32 0.0, %v1931
      %v1933 = vpop.f32.mrf.mxu0
      %v1934 = vpop.f32.mrf.mxu0
      %v1935 = vadd.f32 0.0, %v1934
      %v1936 = vpop.f32.mrf.mxu0
      %1937 = vmatprep.mubr.bf16.mxu0 %v1748
      %1938 = vmatmul.mubr.bf16.gmra.mxu0 %v1747
      %v1939 = vpop.f32.mrf.mxu0
      %v1940 = vadd.f32 0.0, %v1939
      %v1941 = vpop.f32.mrf.mxu0
      %v1942 = vpop.f32.mrf.mxu0
      %v1943 = vadd.f32 0.0, %v1942
      %v1944 = vpop.f32.mrf.mxu0
      %1945 = vmatprep.mubr.bf16.mxu0 %v1750
      %1946 = vmatmul.mubr.bf16.gmra.mxu0 %v1749
      %v1947 = vpop.f32.mrf.mxu0
      %v1948 = vadd.f32 0.0, %v1947
      %v1949 = vpop.f32.mrf.mxu0
      %v1950 = vpop.f32.mrf.mxu0
      %v1951 = vadd.f32 0.0, %v1950
      %v1952 = vpop.f32.mrf.mxu0
      %1953 = vmatprep.mubr.bf16.mxu0 %v1752
      %1954 = vmatmul.mubr.bf16.gmra.mxu0 %v1751
      %v1955 = vpop.f32.mrf.mxu0
      %v1956 = vadd.f32 0.0, %v1955
      %v1957 = vpop.f32.mrf.mxu0
      %v1958 = vpop.f32.mrf.mxu0
      %v1959 = vadd.f32 0.0, %v1958
      %v1960 = vpop.f32.mrf.mxu0
      %1961 = vmatprep.mubr.bf16.mxu0 %v1754
      %1962 = vmatmul.mubr.bf16.gmra.mxu0 %v1753
      %v1963 = vpop.f32.mrf.mxu0
      %v1964 = vadd.f32 0.0, %v1963
      %v1965 = vpop.f32.mrf.mxu0
      %v1966 = vpop.f32.mrf.mxu0
      %v1967 = vadd.f32 0.0, %v1966
      %v1968 = vpop.f32.mrf.mxu0
      %1969 = vmatprep.mubr.bf16.mxu0 %v1756
      %1970 = vmatmul.mubr.bf16.gmra.mxu0 %v1755
      %v1971 = vpop.f32.mrf.mxu0
      %v1972 = vadd.f32 0.0, %v1971
      %v1973 = vpop.f32.mrf.mxu0
      %v1974 = vpop.f32.mrf.mxu0
      %v1975 = vadd.f32 0.0, %v1974
      %v1976 = vpop.f32.mrf.mxu0
      %1977 = vmatprep.mubr.bf16.mxu0 %v1758
      %1978 = vmatmul.mubr.bf16.gmra.mxu0 %v1757
      %v1979 = vpop.f32.mrf.mxu0
      %v1980 = vadd.f32 0.0, %v1979
      %v1981 = vpop.f32.mrf.mxu0
      %v1982 = vpop.f32.mrf.mxu0
      %v1983 = vadd.f32 0.0, %v1982
      %v1984 = vpop.f32.mrf.mxu0
      %1985 = vmatprep.mubr.bf16.mxu0 %v1760
      %1986 = vmatmul.mubr.bf16.gmra.mxu0 %v1759
      %v1987 = vpop.f32.mrf.mxu0
      %v1988 = vadd.f32 0.0, %v1987
      %v1989 = vpop.f32.mrf.mxu0
      %v1990 = vpop.f32.mrf.mxu0
      %v1991 = vadd.f32 0.0, %v1990
      %v1992 = vpop.f32.mrf.mxu0
      %1993 = vmatprep.mubr.bf16.mxu0 %v1762
      %1994 = vmatmul.mubr.bf16.gmra.mxu0 %v1761
      %v1995 = vpop.f32.mrf.mxu0
      %v1996 = vadd.f32 0.0, %v1995
      %v1997 = vpop.f32.mrf.mxu0
      %v1998 = vpop.f32.mrf.mxu0
      %v1999 = vadd.f32 0.0, %v1998
      %v2000 = vpop.f32.mrf.mxu0
      %2001 = vmatprep.mubr.bf16.mxu0 %v1764
      %2002 = vmatmul.mubr.bf16.gmra.mxu0 %v1763
      %v2003 = vpop.f32.mrf.mxu0
      %v2004 = vadd.f32 0.0, %v2003
      %v2005 = vpop.f32.mrf.mxu0
      %v2006 = vpop.f32.mrf.mxu0
      %v2007 = vadd.f32 0.0, %v2006
      %v2008 = vpop.f32.mrf.mxu0
      %2009 = vmatprep.mubr.bf16.mxu0 %v1766
      %2010 = vmatmul.mubr.bf16.gmra.mxu0 %v1765
      %v2011 = vpop.f32.mrf.mxu0
      %v2012 = vadd.f32 0.0, %v2011
      %v2013 = vpop.f32.mrf.mxu0
      %v2014 = vpop.f32.mrf.mxu0
      %v2015 = vadd.f32 0.0, %v2014
      %v2016 = vpop.f32.mrf.mxu0
      %2017 = vmatprep.mubr.bf16.mxu0 %v1768
      %2018 = vmatmul.mubr.bf16.gmra.mxu0 %v1767
      %v2019 = vpop.f32.mrf.mxu0
      %v2020 = vadd.f32 0.0, %v2019
      %v2021 = vpop.f32.mrf.mxu0
      %v2022 = vpop.f32.mrf.mxu0
      %v2023 = vadd.f32 0.0, %v2022
      %v2024 = vpop.f32.mrf.mxu0
      %2025 = vdwg.mxu0
      %v2026 = vadd.f32 %v1705, %v1900
      %v2027 = vadd.f32 %v1706, %v1903
      %v2028 = vadd.f32 %v1707, %v1908
      %v2029 = vadd.f32 %v1708, %v1911
      %v2030 = vadd.f32 %v1709, %v1916
      %v2031 = vadd.f32 %v1710, %v1919
      %v2032 = vadd.f32 %v1711, %v1924
      %v2033 = vadd.f32 %v1712, %v1927
      %v2034 = vadd.f32 %v1713, %v1932
      %v2035 = vadd.f32 %v1714, %v1935
      %v2036 = vadd.f32 %v1715, %v1940
      %v2037 = vadd.f32 %v1716, %v1943
      %v2038 = vadd.f32 %v1717, %v1948
      %v2039 = vadd.f32 %v1718, %v1951
      %v2040 = vadd.f32 %v1719, %v1956
      %v2041 = vadd.f32 %v1720, %v1959
      %v2042 = vadd.f32 %v1721, %v1964
      %v2043 = vadd.f32 %v1722, %v1967
      %v2044 = vadd.f32 %v1723, %v1972
      %v2045 = vadd.f32 %v1724, %v1975
      %v2046 = vadd.f32 %v1725, %v1980
      %v2047 = vadd.f32 %v1726, %v1983
      %v2048 = vadd.f32 %v1727, %v1988
      %v2049 = vadd.f32 %v1728, %v1991
      %v2050 = vadd.f32 %v1729, %v1996
      %v2051 = vadd.f32 %v1730, %v1999
      %v2052 = vadd.f32 %v1731, %v2004
      %v2053 = vadd.f32 %v1732, %v2007
      %v2054 = vadd.f32 %v1733, %v2012
      %v2055 = vadd.f32 %v1734, %v2015
      %v2056 = vadd.f32 %v1735, %v2020
      %v2057 = vadd.f32 %v1736, %v2023
      %2058 = vst [vmem:[#allocation4] sm:$0xff] %v2026
      %2059 = vst [vmem:[#allocation4 + $0x8] sm:$0xff] %v2027
      %2060 = vst [vmem:[#allocation4 + $0x10] sm:$0xff] %v2028
      %2061 = vst [vmem:[#allocation4 + $0x18] sm:$0xff] %v2029
      %2062 = vst [vmem:[#allocation4 + $0x20] sm:$0xff] %v2030
      %2063 = vst [vmem:[#allocation4 + $0x28] sm:$0xff] %v2031
      %2064 = vst [vmem:[#allocation4 + $0x30] sm:$0xff] %v2032
      %2065 = vst [vmem:[#allocation4 + $0x38] sm:$0xff] %v2033
      %2066 = vst [vmem:[#allocation4 + $0x40] sm:$0xff] %v2034
      %2067 = vst [vmem:[#allocation4 + $0x48] sm:$0xff] %v2035
      %2068 = vst [vmem:[#allocation4 + $0x50] sm:$0xff] %v2036
      %2069 = vst [vmem:[#allocation4 + $0x58] sm:$0xff] %v2037
      %2070 = vst [vmem:[#allocation4 + $0x60] sm:$0xff] %v2038
      %2071 = vst [vmem:[#allocation4 + $0x68] sm:$0xff] %v2039
      %2072 = vst [vmem:[#allocation4 + $0x70] sm:$0xff] %v2040
      %2073 = vst [vmem:[#allocation4 + $0x78] sm:$0xff] %v2041
      %2074 = vst [vmem:[#allocation4 + $0x80] sm:$0xff] %v2042
      %2075 = vst [vmem:[#allocation4 + $0x88] sm:$0xff] %v2043
      %2076 = vst [vmem:[#allocation4 + $0x90] sm:$0xff] %v2044
      %2077 = vst [vmem:[#allocation4 + $0x98] sm:$0xff] %v2045
      %2078 = vst [vmem:[#allocation4 + $0xa0] sm:$0xff] %v2046
      %2079 = vst [vmem:[#allocation4 + $0xa8] sm:$0xff] %v2047
      %2080 = vst [vmem:[#allocation4 + $0xb0] sm:$0xff] %v2048
      %2081 = vst [vmem:[#allocation4 + $0xb8] sm:$0xff] %v2049
      %2082 = vst [vmem:[#allocation4 + $0xc0] sm:$0xff] %v2050
      %2083 = vst [vmem:[#allocation4 + $0xc8] sm:$0xff] %v2051
      %2084 = vst [vmem:[#allocation4 + $0xd0] sm:$0xff] %v2052
      %2085 = vst [vmem:[#allocation4 + $0xd8] sm:$0xff] %v2053
      %2086 = vst [vmem:[#allocation4 + $0xe0] sm:$0xff] %v2054
      %2087 = vst [vmem:[#allocation4 + $0xe8] sm:$0xff] %v2055
      %2088 = vst [vmem:[#allocation4 + $0xf0] sm:$0xff] %v2056
      %2089 = vst [vmem:[#allocation4 + $0xf8] sm:$0xff] %v2057
      %2090 = vst.msk [vmem:[#allocation2] sm:$0xff] %vm1672, %v1000
      %2091 = vst.msk [vmem:[#allocation2 + $0x8] sm:$0xff] %vm1672, %v1001
      %2092 = vst.msk [vmem:[#allocation2 + $0x10] sm:$0xff] %vm1672, %v1002
      %2093 = vst.msk [vmem:[#allocation2 + $0x18] sm:$0xff] %vm1672, %v1003
      %2094 = vst.msk [vmem:[#allocation2 + $0x20] sm:$0xff] %vm1672, %v1004
      %2095 = vst.msk [vmem:[#allocation2 + $0x28] sm:$0xff] %vm1672, %v1005
      %2096 = vst.msk [vmem:[#allocation2 + $0x30] sm:$0xff] %vm1672, %v1006
      %2097 = vst.msk [vmem:[#allocation2 + $0x38] sm:$0xff] %vm1672, %v1007
      %2098 = vst.msk [vmem:[#allocation2 + $0x40] sm:$0xff] %vm1672, %v1008
      %2099 = vst.msk [vmem:[#allocation2 + $0x48] sm:$0xff] %vm1672, %v1009
      %2100 = vst.msk [vmem:[#allocation2 + $0x50] sm:$0xff] %vm1672, %v1010
      %2101 = vst.msk [vmem:[#allocation2 + $0x58] sm:$0xff] %vm1672, %v1011
      %2102 = vst.msk [vmem:[#allocation2 + $0x60] sm:$0xff] %vm1672, %v1012
      %2103 = vst.msk [vmem:[#allocation2 + $0x68] sm:$0xff] %vm1672, %v1013
      %2104 = vst.msk [vmem:[#allocation2 + $0x70] sm:$0xff] %vm1672, %v1014
      %2105 = vst.msk [vmem:[#allocation2 + $0x78] sm:$0xff] %vm1672, %v1015
      %2106 = vst.msk [vmem:[#allocation2 + $0x80] sm:$0xff] %vm1672, %v1016
      %2107 = vst.msk [vmem:[#allocation2 + $0x88] sm:$0xff] %vm1672, %v1017
      %2108 = vst.msk [vmem:[#allocation2 + $0x90] sm:$0xff] %vm1672, %v1018
      %2109 = vst.msk [vmem:[#allocation2 + $0x98] sm:$0xff] %vm1672, %v1019
      %2110 = vst.msk [vmem:[#allocation2 + $0xa0] sm:$0xff] %vm1672, %v1020
      %2111 = vst.msk [vmem:[#allocation2 + $0xa8] sm:$0xff] %vm1672, %v1021
      %2112 = vst.msk [vmem:[#allocation2 + $0xb0] sm:$0xff] %vm1672, %v1022
      %2113 = vst.msk [vmem:[#allocation2 + $0xb8] sm:$0xff] %vm1672, %v1023
      %2114 = vst.msk [vmem:[#allocation2 + $0xc0] sm:$0xff] %vm1672, %v1024
      %2115 = vst.msk [vmem:[#allocation2 + $0xc8] sm:$0xff] %vm1672, %v1025
      %2116 = vst.msk [vmem:[#allocation2 + $0xd0] sm:$0xff] %vm1672, %v1026
      %2117 = vst.msk [vmem:[#allocation2 + $0xd8] sm:$0xff] %vm1672, %v1027
      %2118 = vst.msk [vmem:[#allocation2 + $0xe0] sm:$0xff] %vm1672, %v1028
      %2119 = vst.msk [vmem:[#allocation2 + $0xe8] sm:$0xff] %vm1672, %v1029
      %2120 = vst.msk [vmem:[#allocation2 + $0xf0] sm:$0xff] %vm1672, %v1030
      %2121 = vst.msk [vmem:[#allocation2 + $0xf8] sm:$0xff] %vm1672, %v1031
      %p2122 = scmp.eq.s32.totalorder %s21, 1
      // Predicated region
      $region37: #{flash_attention3_forward.1} parent=31 // pred_check
        %p2123 = pneg %p2122
      $region38: #{flash_attention3_forward.1} parent=31 // pred_check_branch
        %2125 = sbr.rel (%p2123) target = $region40
      $region39: #{flash_attention3_forward.1} parent=31 // pred_region
        %v2126 = vld [vmem:[#allocation3] sm:$0xff]
        %v2127 = vld [vmem:[#allocation3 + $0x8] sm:$0xff]
        %v2128 = vld [vmem:[#allocation3 + $0x10] sm:$0xff]
        %v2129 = vld [vmem:[#allocation3 + $0x18] sm:$0xff]
        %v2130 = vld [vmem:[#allocation3 + $0x20] sm:$0xff]
        %v2131 = vld [vmem:[#allocation3 + $0x28] sm:$0xff]
        %v2132 = vld [vmem:[#allocation3 + $0x30] sm:$0xff]
        %v2133 = vld [vmem:[#allocation3 + $0x38] sm:$0xff]
        %v2134 = vld [vmem:[#allocation3 + $0x40] sm:$0xff]
        %v2135 = vld [vmem:[#allocation3 + $0x48] sm:$0xff]
        %v2136 = vld [vmem:[#allocation3 + $0x50] sm:$0xff]
        %v2137 = vld [vmem:[#allocation3 + $0x58] sm:$0xff]
        %v2138 = vld [vmem:[#allocation3 + $0x60] sm:$0xff]
        %v2139 = vld [vmem:[#allocation3 + $0x68] sm:$0xff]
        %v2140 = vld [vmem:[#allocation3 + $0x70] sm:$0xff]
        %v2141 = vld [vmem:[#allocation3 + $0x78] sm:$0xff]
        %v2142 = vld [vmem:[#allocation3 + $0x80] sm:$0xff]
        %v2143 = vld [vmem:[#allocation3 + $0x88] sm:$0xff]
        %v2144 = vld [vmem:[#allocation3 + $0x90] sm:$0xff]
        %v2145 = vld [vmem:[#allocation3 + $0x98] sm:$0xff]
        %v2146 = vld [vmem:[#allocation3 + $0xa0] sm:$0xff]
        %v2147 = vld [vmem:[#allocation3 + $0xa8] sm:$0xff]
        %v2148 = vld [vmem:[#allocation3 + $0xb0] sm:$0xff]
        %v2149 = vld [vmem:[#allocation3 + $0xb8] sm:$0xff]
        %v2150 = vld [vmem:[#allocation3 + $0xc0] sm:$0xff]
        %v2151 = vld [vmem:[#allocation3 + $0xc8] sm:$0xff]
        %v2152 = vld [vmem:[#allocation3 + $0xd0] sm:$0xff]
        %v2153 = vld [vmem:[#allocation3 + $0xd8] sm:$0xff]
        %v2154 = vld [vmem:[#allocation3 + $0xe0] sm:$0xff]
        %v2155 = vld [vmem:[#allocation3 + $0xe8] sm:$0xff]
        %v2156 = vld [vmem:[#allocation3 + $0xf0] sm:$0xff]
        %v2157 = vld [vmem:[#allocation3 + $0xf8] sm:$0xff]
        %v2158 = vrcp.pop %v2126
        %v2159 = vrcp.pop %v2127
        %v2160 = vrcp.pop %v2128
        %v2161 = vrcp.pop %v2129
        %v2162 = vrcp.pop %v2130
        %v2163 = vrcp.pop %v2131
        %v2164 = vrcp.pop %v2132
        %v2165 = vrcp.pop %v2133
        %v2166 = vrcp.pop %v2134
        %v2167 = vrcp.pop %v2135
        %v2168 = vrcp.pop %v2136
        %v2169 = vrcp.pop %v2137
        %v2170 = vrcp.pop %v2138
        %v2171 = vrcp.pop %v2139
        %v2172 = vrcp.pop %v2140
        %v2173 = vrcp.pop %v2141
        %v2174 = vrcp.pop %v2142
        %v2175 = vrcp.pop %v2143
        %v2176 = vrcp.pop %v2144
        %v2177 = vrcp.pop %v2145
        %v2178 = vrcp.pop %v2146
        %v2179 = vrcp.pop %v2147
        %v2180 = vrcp.pop %v2148
        %v2181 = vrcp.pop %v2149
        %v2182 = vrcp.pop %v2150
        %v2183 = vrcp.pop %v2151
        %v2184 = vrcp.pop %v2152
        %v2185 = vrcp.pop %v2153
        %v2186 = vrcp.pop %v2154
        %v2187 = vrcp.pop %v2155
        %v2188 = vrcp.pop %v2156
        %v2189 = vrcp.pop %v2157
        %v2190 = vld [vmem:[#allocation4] sm:$0xff]
        %v2191 = vld [vmem:[#allocation4 + $0x8] sm:$0xff]
        %v2192 = vld [vmem:[#allocation4 + $0x10] sm:$0xff]
        %v2193 = vld [vmem:[#allocation4 + $0x18] sm:$0xff]
        %v2194 = vld [vmem:[#allocation4 + $0x20] sm:$0xff]
        %v2195 = vld [vmem:[#allocation4 + $0x28] sm:$0xff]
        %v2196 = vld [vmem:[#allocation4 + $0x30] sm:$0xff]
        %v2197 = vld [vmem:[#allocation4 + $0x38] sm:$0xff]
        %v2198 = vld [vmem:[#allocation4 + $0x40] sm:$0xff]
        %v2199 = vld [vmem:[#allocation4 + $0x48] sm:$0xff]
        %v2200 = vld [vmem:[#allocation4 + $0x50] sm:$0xff]
        %v2201 = vld [vmem:[#allocation4 + $0x58] sm:$0xff]
        %v2202 = vld [vmem:[#allocation4 + $0x60] sm:$0xff]
        %v2203 = vld [vmem:[#allocation4 + $0x68] sm:$0xff]
        %v2204 = vld [vmem:[#allocation4 + $0x70] sm:$0xff]
        %v2205 = vld [vmem:[#allocation4 + $0x78] sm:$0xff]
        %v2206 = vld [vmem:[#allocation4 + $0x80] sm:$0xff]
        %v2207 = vld [vmem:[#allocation4 + $0x88] sm:$0xff]
        %v2208 = vld [vmem:[#allocation4 + $0x90] sm:$0xff]
        %v2209 = vld [vmem:[#allocation4 + $0x98] sm:$0xff]
        %v2210 = vld [vmem:[#allocation4 + $0xa0] sm:$0xff]
        %v2211 = vld [vmem:[#allocation4 + $0xa8] sm:$0xff]
        %v2212 = vld [vmem:[#allocation4 + $0xb0] sm:$0xff]
        %v2213 = vld [vmem:[#allocation4 + $0xb8] sm:$0xff]
        %v2214 = vld [vmem:[#allocation4 + $0xc0] sm:$0xff]
        %v2215 = vld [vmem:[#allocation4 + $0xc8] sm:$0xff]
        %v2216 = vld [vmem:[#allocation4 + $0xd0] sm:$0xff]
        %v2217 = vld [vmem:[#allocation4 + $0xd8] sm:$0xff]
        %v2218 = vld [vmem:[#allocation4 + $0xe0] sm:$0xff]
        %v2219 = vld [vmem:[#allocation4 + $0xe8] sm:$0xff]
        %v2220 = vld [vmem:[#allocation4 + $0xf0] sm:$0xff]
        %v2221 = vld [vmem:[#allocation4 + $0xf8] sm:$0xff]
        %2223 = vset.pattern.permute.xlu0 0
        %2224 = vperm.xlu0 %2223, %v2158
        %v2225 = vpop.permute.xlu0 %2224
        %2228 = vset.pattern.permute.xlu0 0
        %2229 = vperm.xlu0 %2228, %v2159
        %v2230 = vpop.permute.xlu0 %2229
        %2233 = vset.pattern.permute.xlu0 0
        %2234 = vperm.xlu0 %2233, %v2160
        %v2235 = vpop.permute.xlu0 %2234
        %2238 = vset.pattern.permute.xlu0 0
        %2239 = vperm.xlu0 %2238, %v2161
        %v2240 = vpop.permute.xlu0 %2239
        %2243 = vset.pattern.permute.xlu0 0
        %2244 = vperm.xlu0 %2243, %v2162
        %v2245 = vpop.permute.xlu0 %2244
        %2248 = vset.pattern.permute.xlu0 0
        %2249 = vperm.xlu0 %2248, %v2163
        %v2250 = vpop.permute.xlu0 %2249
        %2253 = vset.pattern.permute.xlu0 0
        %2254 = vperm.xlu0 %2253, %v2164
        %v2255 = vpop.permute.xlu0 %2254
        %2258 = vset.pattern.permute.xlu0 0
        %2259 = vperm.xlu0 %2258, %v2165
        %v2260 = vpop.permute.xlu0 %2259
        %2263 = vset.pattern.permute.xlu0 0
        %2264 = vperm.xlu0 %2263, %v2166
        %v2265 = vpop.permute.xlu0 %2264
        %2268 = vset.pattern.permute.xlu0 0
        %2269 = vperm.xlu0 %2268, %v2167
        %v2270 = vpop.permute.xlu0 %2269
        %2273 = vset.pattern.permute.xlu0 0
        %2274 = vperm.xlu0 %2273, %v2168
        %v2275 = vpop.permute.xlu0 %2274
        %2278 = vset.pattern.permute.xlu0 0
        %2279 = vperm.xlu0 %2278, %v2169
        %v2280 = vpop.permute.xlu0 %2279
        %2283 = vset.pattern.permute.xlu0 0
        %2284 = vperm.xlu0 %2283, %v2170
        %v2285 = vpop.permute.xlu0 %2284
        %2288 = vset.pattern.permute.xlu0 0
        %2289 = vperm.xlu0 %2288, %v2171
        %v2290 = vpop.permute.xlu0 %2289
        %2293 = vset.pattern.permute.xlu0 0
        %2294 = vperm.xlu0 %2293, %v2172
        %v2295 = vpop.permute.xlu0 %2294
        %2298 = vset.pattern.permute.xlu0 0
        %2299 = vperm.xlu0 %2298, %v2173
        %v2300 = vpop.permute.xlu0 %2299
        %2303 = vset.pattern.permute.xlu0 0
        %2304 = vperm.xlu0 %2303, %v2174
        %v2305 = vpop.permute.xlu0 %2304
        %2308 = vset.pattern.permute.xlu0 0
        %2309 = vperm.xlu0 %2308, %v2175
        %v2310 = vpop.permute.xlu0 %2309
        %2313 = vset.pattern.permute.xlu0 0
        %2314 = vperm.xlu0 %2313, %v2176
        %v2315 = vpop.permute.xlu0 %2314
        %2318 = vset.pattern.permute.xlu0 0
        %2319 = vperm.xlu0 %2318, %v2177
        %v2320 = vpop.permute.xlu0 %2319
        %2323 = vset.pattern.permute.xlu0 0
        %2324 = vperm.xlu0 %2323, %v2178
        %v2325 = vpop.permute.xlu0 %2324
        %2328 = vset.pattern.permute.xlu0 0
        %2329 = vperm.xlu0 %2328, %v2179
        %v2330 = vpop.permute.xlu0 %2329
        %2333 = vset.pattern.permute.xlu0 0
        %2334 = vperm.xlu0 %2333, %v2180
        %v2335 = vpop.permute.xlu0 %2334
        %2338 = vset.pattern.permute.xlu0 0
        %2339 = vperm.xlu0 %2338, %v2181
        %v2340 = vpop.permute.xlu0 %2339
        %2343 = vset.pattern.permute.xlu0 0
        %2344 = vperm.xlu0 %2343, %v2182
        %v2345 = vpop.permute.xlu0 %2344
        %2348 = vset.pattern.permute.xlu0 0
        %2349 = vperm.xlu0 %2348, %v2183
        %v2350 = vpop.permute.xlu0 %2349
        %2353 = vset.pattern.permute.xlu0 0
        %2354 = vperm.xlu0 %2353, %v2184
        %v2355 = vpop.permute.xlu0 %2354
        %2358 = vset.pattern.permute.xlu0 0
        %2359 = vperm.xlu0 %2358, %v2185
        %v2360 = vpop.permute.xlu0 %2359
        %2363 = vset.pattern.permute.xlu0 0
        %2364 = vperm.xlu0 %2363, %v2186
        %v2365 = vpop.permute.xlu0 %2364
        %2368 = vset.pattern.permute.xlu0 0
        %2369 = vperm.xlu0 %2368, %v2187
        %v2370 = vpop.permute.xlu0 %2369
        %2373 = vset.pattern.permute.xlu0 0
        %2374 = vperm.xlu0 %2373, %v2188
        %v2375 = vpop.permute.xlu0 %2374
        %2378 = vset.pattern.permute.xlu0 0
        %2379 = vperm.xlu0 %2378, %v2189
        %v2380 = vpop.permute.xlu0 %2379
        %v2382 = vmul.f32 %v2190, %v2225
        %v2383 = vmul.f32 %v2191, %v2230
        %v2384 = vmul.f32 %v2192, %v2235
        %v2385 = vmul.f32 %v2193, %v2240
        %v2386 = vmul.f32 %v2194, %v2245
        %v2387 = vmul.f32 %v2195, %v2250
        %v2388 = vmul.f32 %v2196, %v2255
        %v2389 = vmul.f32 %v2197, %v2260
        %v2390 = vmul.f32 %v2198, %v2265
        %v2391 = vmul.f32 %v2199, %v2270
        %v2392 = vmul.f32 %v2200, %v2275
        %v2393 = vmul.f32 %v2201, %v2280
        %v2394 = vmul.f32 %v2202, %v2285
        %v2395 = vmul.f32 %v2203, %v2290
        %v2396 = vmul.f32 %v2204, %v2295
        %v2397 = vmul.f32 %v2205, %v2300
        %v2398 = vmul.f32 %v2206, %v2305
        %v2399 = vmul.f32 %v2207, %v2310
        %v2400 = vmul.f32 %v2208, %v2315
        %v2401 = vmul.f32 %v2209, %v2320
        %v2402 = vmul.f32 %v2210, %v2325
        %v2403 = vmul.f32 %v2211, %v2330
        %v2404 = vmul.f32 %v2212, %v2335
        %v2405 = vmul.f32 %v2213, %v2340
        %v2406 = vmul.f32 %v2214, %v2345
        %v2407 = vmul.f32 %v2215, %v2350
        %v2408 = vmul.f32 %v2216, %v2355
        %v2409 = vmul.f32 %v2217, %v2360
        %v2410 = vmul.f32 %v2218, %v2365
        %v2411 = vmul.f32 %v2219, %v2370
        %v2412 = vmul.f32 %v2220, %v2375
        %v2413 = vmul.f32 %v2221, %v2380
        %v2414 = vpack.c.bf16 %v2383, %v2382
        %v2415 = vpack.c.bf16 %v2385, %v2384
        %v2416 = vpack.c.bf16 %v2387, %v2386
        %v2417 = vpack.c.bf16 %v2389, %v2388
        %v2418 = vpack.c.bf16 %v2391, %v2390
        %v2419 = vpack.c.bf16 %v2393, %v2392
        %v2420 = vpack.c.bf16 %v2395, %v2394
        %v2421 = vpack.c.bf16 %v2397, %v2396
        %v2422 = vpack.c.bf16 %v2399, %v2398
        %v2423 = vpack.c.bf16 %v2401, %v2400
        %v2424 = vpack.c.bf16 %v2403, %v2402
        %v2425 = vpack.c.bf16 %v2405, %v2404
        %v2426 = vpack.c.bf16 %v2407, %v2406
        %v2427 = vpack.c.bf16 %v2409, %v2408
        %v2428 = vpack.c.bf16 %v2411, %v2410
        %v2429 = vpack.c.bf16 %v2413, %v2412
        %v2446 = vunpack.c.l.b16 %v2414
        %v2447 = vunpack.c.h.b16 %v2414
        %v2448 = vunpack.c.l.b16 %v2415
        %v2449 = vunpack.c.h.b16 %v2415
        %v2450 = vunpack.c.l.b16 %v2416
        %v2451 = vunpack.c.h.b16 %v2416
        %v2452 = vunpack.c.l.b16 %v2417
        %v2453 = vunpack.c.h.b16 %v2417
        %v2454 = vunpack.c.l.b16 %v2418
        %v2455 = vunpack.c.h.b16 %v2418
        %v2456 = vunpack.c.l.b16 %v2419
        %v2457 = vunpack.c.h.b16 %v2419
        %v2458 = vunpack.c.l.b16 %v2420
        %v2459 = vunpack.c.h.b16 %v2420
        %v2460 = vunpack.c.l.b16 %v2421
        %v2461 = vunpack.c.h.b16 %v2421
        %v2462 = vunpack.c.l.b16 %v2422
        %v2463 = vunpack.c.h.b16 %v2422
        %v2464 = vunpack.c.l.b16 %v2423
        %v2465 = vunpack.c.h.b16 %v2423
        %v2466 = vunpack.c.l.b16 %v2424
        %v2467 = vunpack.c.h.b16 %v2424
        %v2468 = vunpack.c.l.b16 %v2425
        %v2469 = vunpack.c.h.b16 %v2425
        %v2470 = vunpack.c.l.b16 %v2426
        %v2471 = vunpack.c.h.b16 %v2426
        %v2472 = vunpack.c.l.b16 %v2427
        %v2473 = vunpack.c.h.b16 %v2427
        %v2474 = vunpack.c.l.b16 %v2428
        %v2475 = vunpack.c.h.b16 %v2428
        %v2476 = vunpack.c.l.b16 %v2429
        %v2477 = vunpack.c.h.b16 %v2429
        %v2478 = vpack.c.b16 %v2446, %v2446
        %v2479 = vpack.c.b16 %v2447, %v2447
        %v2480 = vpack.c.b16 %v2448, %v2448
        %v2481 = vpack.c.b16 %v2449, %v2449
        %v2482 = vpack.c.b16 %v2450, %v2450
        %v2483 = vpack.c.b16 %v2451, %v2451
        %v2484 = vpack.c.b16 %v2452, %v2452
        %v2485 = vpack.c.b16 %v2453, %v2453
        %v2486 = vpack.c.b16 %v2454, %v2454
        %v2487 = vpack.c.b16 %v2455, %v2455
        %v2488 = vpack.c.b16 %v2456, %v2456
        %v2489 = vpack.c.b16 %v2457, %v2457
        %v2490 = vpack.c.b16 %v2458, %v2458
        %v2491 = vpack.c.b16 %v2459, %v2459
        %v2492 = vpack.c.b16 %v2460, %v2460
        %v2493 = vpack.c.b16 %v2461, %v2461
        %v2494 = vpack.c.b16 %v2462, %v2462
        %v2495 = vpack.c.b16 %v2463, %v2463
        %v2496 = vpack.c.b16 %v2464, %v2464
        %v2497 = vpack.c.b16 %v2465, %v2465
        %v2498 = vpack.c.b16 %v2466, %v2466
        %v2499 = vpack.c.b16 %v2467, %v2467
        %v2500 = vpack.c.b16 %v2468, %v2468
        %v2501 = vpack.c.b16 %v2469, %v2469
        %v2502 = vpack.c.b16 %v2470, %v2470
        %v2503 = vpack.c.b16 %v2471, %v2471
        %v2504 = vpack.c.b16 %v2472, %v2472
        %v2505 = vpack.c.b16 %v2473, %v2473
        %v2506 = vpack.c.b16 %v2474, %v2474
        %v2507 = vpack.c.b16 %v2475, %v2475
        %v2508 = vpack.c.b16 %v2476, %v2476
        %v2509 = vpack.c.b16 %v2477, %v2477
        %2542 = vst [vmem:[%s287] sm:$0xf] %v2478
        %2543 = vst [vmem:[%s287 + $0x4] sm:$0xf] %v2479
        %2544 = vst [vmem:[%s287 + $0x8] sm:$0xf] %v2480
        %2545 = vst [vmem:[%s287 + $0xc] sm:$0xf] %v2481
        %2546 = vst [vmem:[%s287 + $0x10] sm:$0xf] %v2482
        %2547 = vst [vmem:[%s287 + $0x14] sm:$0xf] %v2483
        %2548 = vst [vmem:[%s287 + $0x18] sm:$0xf] %v2484
        %2549 = vst [vmem:[%s287 + $0x1c] sm:$0xf] %v2485
        %2550 = vst [vmem:[%s287 + $0x20] sm:$0xf] %v2486
        %2551 = vst [vmem:[%s287 + $0x24] sm:$0xf] %v2487
        %2552 = vst [vmem:[%s287 + $0x28] sm:$0xf] %v2488
        %2553 = vst [vmem:[%s287 + $0x2c] sm:$0xf] %v2489
        %2554 = vst [vmem:[%s287 + $0x30] sm:$0xf] %v2490
        %2555 = vst [vmem:[%s287 + $0x34] sm:$0xf] %v2491
        %2556 = vst [vmem:[%s287 + $0x38] sm:$0xf] %v2492
        %2557 = vst [vmem:[%s287 + $0x3c] sm:$0xf] %v2493
        %2558 = vst [vmem:[%s287 + $0x40] sm:$0xf] %v2494
        %2559 = vst [vmem:[%s287 + $0x44] sm:$0xf] %v2495
        %2560 = vst [vmem:[%s287 + $0x48] sm:$0xf] %v2496
        %2561 = vst [vmem:[%s287 + $0x4c] sm:$0xf] %v2497
        %2562 = vst [vmem:[%s287 + $0x50] sm:$0xf] %v2498
        %2563 = vst [vmem:[%s287 + $0x54] sm:$0xf] %v2499
        %2564 = vst [vmem:[%s287 + $0x58] sm:$0xf] %v2500
        %2565 = vst [vmem:[%s287 + $0x5c] sm:$0xf] %v2501
        %2566 = vst [vmem:[%s287 + $0x60] sm:$0xf] %v2502
        %2567 = vst [vmem:[%s287 + $0x64] sm:$0xf] %v2503
        %2568 = vst [vmem:[%s287 + $0x68] sm:$0xf] %v2504
        %2569 = vst [vmem:[%s287 + $0x6c] sm:$0xf] %v2505
        %2570 = vst [vmem:[%s287 + $0x70] sm:$0xf] %v2506
        %2571 = vst [vmem:[%s287 + $0x74] sm:$0xf] %v2507
        %2572 = vst [vmem:[%s287 + $0x78] sm:$0xf] %v2508
        %2573 = vst [vmem:[%s287 + $0x7c] sm:$0xf] %v2509
      $region40: #{flash_attention3_forward.1} parent=31 // pred_fallthru
        _
      %s2574 = smul.u32 32, %s20
      %p2575 = scmp.lt.s32.totalorder %s19, 3
      %s2576 = scalar_select %p2575, %s19, 3
      %p2577 = scmp.lt.s32.totalorder %s2574, 63
      %s2578 = scalar_select %p2577, %s2574, 63
      %s2579 = smul.addr %s2576, 64
      %s2580 = sadd.s32 %s2578, %s2579
      %s2581 = smul.addr %s2580, 4
      %s2582 = scalar_lea.vmem %s3, %s2581
      // Predicated region
      $region41: #{flash_attention3_forward.1} parent=31 // pred_check
        %p2583 = pneg %p137
      $region42: #{flash_attention3_forward.1} parent=31 // pred_check_branch
        %2585 = sbr.rel (%p2583) target = $region44
      $region43: #{flash_attention3_forward.1} parent=31 // pred_region
        %s2586 = smul.u32 32, %s20
      $region44: #{flash_attention3_forward.1} parent=31 // pred_fallthru
        _
    $region32: #{flash_attention3_forward.1} parent=5 // pred_fallthru
      _
    %p2587 = scmp.le.s32.totalorder 2, %s9
    // Predicated region
    $region45: #{flash_attention3_forward.1} parent=5 // pred_check
      %p2588 = pneg %p2587
    $region46: #{flash_attention3_forward.1} parent=5 // pred_check_branch
      %2590 = sbr.rel (%p2588) target = $region48
    $region47: #{flash_attention3_forward.1} parent=5 // pred_region
      %s2591 = ssub.s32 %s9, 2
      // Predicated region
      $region49: #{flash_attention3_forward.1} parent=47 // pred_check
        %p2592 = pneg %p143
      $region50: #{flash_attention3_forward.1} parent=47 // pred_check_branch
        %2594 = sbr.rel (%p2592) target = $region52
      $region51: #{flash_attention3_forward.1} parent=47 // pred_region
        %s2595 = smul.u32 32, %s23
        %p2596 = scmp.lt.s32.totalorder %s22, 3
        %s2597 = scalar_select %p2596, %s22, 3
        %p2598 = scmp.lt.s32.totalorder %s2595, 63
        %s2599 = scalar_select %p2598, %s2595, 63
        %s2600 = smul.addr %s2597, 64
        %s2601 = sadd.s32 %s2599, %s2600
        %s2602 = smul.addr %s2601, 4
        %s2603 = scalar_lea.vmem %s3, %s2602
      $region52: #{flash_attention3_forward.1} parent=47 // pred_fallthru
        _
    $region48: #{flash_attention3_forward.1} parent=5 // pred_fallthru
      _
  $region6: #{flash_attention3_forward.1} parent=0 // loop_footer
    %s13 = sadd.s32 1, %s9
  $region7: #{flash_attention3_forward.1} parent=0 // loop_footer_branch
    %8 = sbr.rel target = $region3
  $region8: #{flash_attention3_forward.1} parent=0 // loop_exit
    _

</llo_original>
